<compile_context>
chip_gen: v7x
topology: tpu7x:2x2x1
jax: 0.10.0
libtpu: 0.0.40
codegen_flags: <defaults>
</compile_context>

<pallas_src>
import jax
import jax.numpy as jnp
from jax.experimental import pallas as pl
from jax.experimental.pallas import tpu as pltpu

EPS = 1e-5


# ------------------------------ Pallas kernel ------------------------------ #

def _make_fused_kernel(N, H, W, Cin, Cout):
    NH = N * H
    NHo = N * (H // 2)
    L2 = W * Cout                       # lane width of conv outputs (= 128 here)
    inv_count = 1.0 / float(N * H * W)  # static BN averaging constant

    def kernel(a1_ref, b1_ref, b2_ref, chan_ref, bn_ref, psel_ref, y_ref, p_ref):
        f32 = jnp.float32

        # h index within each image; masks zero the vertical-tap halo at image borders
        h = jax.lax.broadcasted_iota(jnp.int32, (NH, 1), 0) % H
        m_up = h >= 1            # tap kh=0 reads input row h-1
        m_dn = h <= H - 2        # tap kh=2 reads input row h+1

        chan = chan_ref[...].astype(f32)   # 0/1 per-channel reducer (exact in bf16 DMA)
        psel = psel_ref[...].astype(f32)   # 0/1 pool lane compactor (exact in bf16 DMA)
        bnp = bn_ref[...]                  # (4, W*Cout): [gamma1, beta1, gamma2, beta2]

        def conv3x3(x, w_ref):
            # x: (NH, W*Ci) f32; w_ref: (3, W*Ci, W*Cout) bf16 banded W-tap weights.
            # Vertical taps via sublane roll + border mask (no dense shift matmul).
            x_up = jnp.where(m_up, pltpu.roll(x, shift=1, axis=0), 0.0)
            x_dn = jnp.where(m_dn, pltpu.roll(x, shift=NH - 1, axis=0), 0.0)
            acc = jnp.dot(x_up, w_ref[0].astype(f32), preferred_element_type=f32)
            acc = acc + jnp.dot(x, w_ref[1].astype(f32), preferred_element_type=f32)
            acc = acc + jnp.dot(x_dn, w_ref[2].astype(f32), preferred_element_type=f32)
            return acc

        def bn_relu(z, gamma, beta):
            # training-mode BN: biased batch stats per channel over (N, H, W),
            # single fused (2, lanes) stats matmul, var clamped >= 0, then FMA + ReLU.
            stats = jnp.concatenate(
                [jnp.sum(z, axis=0, keepdims=True),
                 jnp.sum(z * z, axis=0, keepdims=True)], axis=0)        # (2, W*Cout)
            sred = jnp.dot(stats, chan, preferred_element_type=f32)
            mean = sred[0:1, :] * inv_count
            var = jnp.maximum(sred[1:2, :] * inv_count - mean * mean, 0.0)
            scale = gamma * jax.lax.rsqrt(var + EPS)
            shift = beta - mean * scale
            return jnp.maximum(z * scale + shift, 0.0)

        x1 = bn_relu(conv3x3(a1_ref[...], b1_ref), bnp[0:1, :], bnp[1:2, :])
        y = bn_relu(conv3x3(x1, b2_ref), bnp[2:3, :], bnp[3:4, :])
        y_ref[...] = y                     # lane-dense (NH, W*Cout) unmasked store

        # fused 2x2 / stride-2 max pool:
        #   H direction: strided sublane reads of even/odd rows + elementwise max
        rmax = jnp.maximum(y_ref[pl.ds(0, NHo, stride=2), :],
                           y_ref[pl.ds(1, NHo, stride=2), :])
        #   W direction: lane roll by Cout pairs (w, w+1) lanes + max, then one 0/1
        #   selector matmul compacts even-w lanes into the first Wo*Cout output lanes
        #   (remaining lanes zero => the pooled store stays a full 128-lane vst).
        wmax = jnp.maximum(rmax, pltpu.roll(rmax, shift=L2 - Cout, axis=1))
        p_ref[...] = jnp.dot(wmax, psel, preferred_element_type=f32)

    return kernel


# ------------------------------- JAX wrapper -------------------------------- #

def downsample_block_forward(x, w1, b1, g1, be1, w2, b2, g2, be2):
    """x: (N, Cin, H, W) NCHW.  Returns (pooled NCHW, y NCHW) like the PyTorch module."""
    N, Cin, H, W = x.shape
    Cout = w1.shape[0]
    Ho, Wo = H // 2, W // 2
    f32, bf16 = jnp.float32, jnp.bfloat16

    # Conv biases are mathematically cancelled by training-mode BN mean subtraction.
    del b1, b2

    # activations as (rows = N*H, lanes = W*C)
    a1 = jnp.transpose(x, (0, 2, 3, 1)).reshape(N * H, W * Cin).astype(f32)

    def banded(w, cin, cout):
        # B[kh, wi*cin+ci, wo*cout+co] = w[co, ci, kh, wi-wo+1] when the W-tap is in
        # range (zero padding folded in).  Shipped as bf16 to halve constant DMA.
        # TODO(synk): at real W switch to per-tap (Cin,Cout) weights + lane rolls.
        wi = jnp.arange(W)[:, None]
        wo = jnp.arange(W)[None, :]
        dx = wi - wo + 1
        valid = ((dx >= 0) & (dx < 3)).astype(f32)
        dxc = jnp.clip(dx, 0, 2)
        wt = jnp.transpose(w.astype(f32), (2, 3, 1, 0))            # (kh, kw, cin, cout)
        band = wt[:, dxc, :, :] * valid[None, :, :, None, None]    # (3, W, W, cin, cout)
        return jnp.transpose(band, (0, 1, 3, 2, 4)).reshape(3, W * cin, W * cout).astype(bf16)

    B1 = banded(w1, Cin, Cout)            # (3, W*Cin,  W*Cout) bf16
    B2 = banded(w2, Cout, Cout)           # (3, W*Cout, W*Cout) bf16

    # per-channel reduction matrix over the (w, c) lane layout (0/1 -> exact in bf16)
    lane = jnp.arange(W * Cout)
    chan = (lane[:, None] % Cout == lane[None, :] % Cout).astype(bf16)

    # BN affine params tiled over W so lane (w*Cout + co) -> param[co]  (kept f32)
    bn = jnp.stack([jnp.tile(g1.astype(f32), W), jnp.tile(be1.astype(f32), W),
                    jnp.tile(g2.astype(f32), W), jnp.tile(be2.astype(f32), W)])

    # W-pool lane compactor: output lane (jw*Cout+co) <- source lane (2*jw*Cout+co);
    # columns >= Wo*Cout stay zero so the pooled output is a full 128-lane slab.
    outl = jnp.arange(W * Cout)
    src = 2 * (outl // Cout) * Cout + (outl % Cout)
    psel = ((lane[:, None] == src[None, :]) &
            (outl[None, :] < Wo * Cout)).astype(bf16)

    kernel = _make_fused_kernel(N, H, W, Cin, Cout)
    vmem = lambda: pl.BlockSpec(memory_space=pltpu.MemorySpace.VMEM)

    y_flat, p_pad = pl.pallas_call(
        kernel,
        out_shape=(jax.ShapeDtypeStruct((N * H, W * Cout), f32),
                   jax.ShapeDtypeStruct((N * Ho, W * Cout), f32)),
        in_specs=[vmem() for _ in range(6)],
        out_specs=(vmem(), vmem()),
    )(a1, B1, B2, chan, bn, psel)

    y = jnp.transpose(y_flat.reshape(N, H, W, Cout), (0, 3, 1, 2))
    pooled = jnp.transpose(p_pad[:, :Wo * Cout].reshape(N, Ho, Wo, Cout), (0, 3, 1, 2))
    return pooled, y


# ---------------------------- pure-JAX reference ---------------------------- #

def ref_forward(x, w1, b1, g1, be1, w2, b2, g2, be2):
    def conv(xx, w, b):
        out = jax.lax.conv_general_dilated(
            xx, w, window_strides=(1, 1), padding="SAME",
            dimension_numbers=("NCHW", "OIHW", "NCHW"))
        return out + b[None, :, None, None]

    def bn_relu(z, g, be):
        mu = jnp.mean(z, axis=(0, 2, 3), keepdims=True)
        var = jnp.mean((z - mu) ** 2, axis=(0, 2, 3), keepdims=True)
        zn = (z - mu) * jax.lax.rsqrt(var + EPS)
        return jnp.maximum(zn * g[None, :, None, None] + be[None, :, None, None], 0.0)

    x1 = bn_relu(conv(x, w1, b1), g1, be1)
    y = bn_relu(conv(x1, w2, b2), g2, be2)
    pooled = jax.lax.reduce_window(y, -jnp.inf, jax.lax.max,
                                   (1, 1, 2, 2), (1, 1, 2, 2), "VALID")
    return pooled, y


# ----------------------------------- main ----------------------------------- #

if __name__ == "__main__":
    N, Cin, Cout, H, W = 2, 4, 8, 16, 16
    ks = jax.random.split(jax.random.PRNGKey(0), 9)

    x = jax.random.normal(ks[0], (N, Cin, H, W), jnp.float32)
    w1 = 0.1 * jax.random.normal(ks[1], (Cout, Cin, 3, 3), jnp.float32)
    b1 = 0.1 * jax.random.normal(ks[2], (Cout,), jnp.float32)
    g1 = 1.0 + 0.1 * jax.random.normal(ks[3], (Cout,), jnp.float32)
    be1 = 0.1 * jax.random.normal(ks[4], (Cout,), jnp.float32)
    w2 = 0.1 * jax.random.normal(ks[5], (Cout, Cout, 3, 3), jnp.float32)
    b2 = 0.1 * jax.random.normal(ks[6], (Cout,), jnp.float32)
    g2 = 1.0 + 0.1 * jax.random.normal(ks[7], (Cout,), jnp.float32)
    be2 = 0.1 * jax.random.normal(ks[8], (Cout,), jnp.float32)

    fwd = jax.jit(downsample_block_forward)
    pooled, y = fwd(x, w1, b1, g1, be1, w2, b2, g2, be2)
    jax.block_until_ready((pooled, y))

    pooled_ref, y_ref = ref_forward(x, w1, b1, g1, be1, w2, b2, g2, be2)
    assert pooled.shape == (N, Cout, H // 2, W // 2) and y.shape == (N, Cout, H, W)
    assert float(jnp.max(jnp.abs(y - y_ref))) < 2e-2
    assert float(jnp.max(jnp.abs(pooled - pooled_ref))) < 2e-2

    print("KERNEL_OK")
</pallas_src>

<mosaic_0001>
module attributes {stable_mosaic.version = 11 : i64} {
  func.func @kernel(%arg0: memref<32x64xf32, #tpu.memory_space<vmem>>, %arg1: memref<3x64x128xbf16, #tpu.memory_space<vmem>>, %arg2: memref<3x128x128xbf16, #tpu.memory_space<vmem>>, %arg3: memref<128x128xbf16, #tpu.memory_space<vmem>>, %arg4: memref<4x128xf32, #tpu.memory_space<vmem>>, %arg5: memref<128x128xbf16, #tpu.memory_space<vmem>>, %arg6: memref<32x128xf32, #tpu.memory_space<vmem>>, %arg7: memref<16x128xf32, #tpu.memory_space<vmem>>) attributes {dimension_semantics = [], scalar_prefetch = 0 : i64, scratch_operands = 0 : i64, tpu.core_type = #tpu.core_type<tc>} {
    %0 = tpu.iota {dimensions = array<i32: 0>} : vector<32x1xi32>
    %c16_i32 = arith.constant 16 : i32
    %c0_i32 = arith.constant 0 : i32
    %1 = arith.cmpi eq, %c16_i32, %c0_i32 : i32
    %c1_i32 = arith.constant 1 : i32
    %2 = arith.select %1, %c1_i32, %c16_i32 : i32
    %3 = vector.broadcast %2 : i32 to vector<32x1xi32>
    %4 = arith.remsi %0, %3 : vector<32x1xi32>
    %c0_i32_0 = arith.constant 0 : i32
    %5 = vector.broadcast %c0_i32_0 : i32 to vector<32x1xi32>
    %6 = arith.cmpi ne, %4, %5 : vector<32x1xi32>
    %c0_i32_1 = arith.constant 0 : i32
    %7 = vector.broadcast %c0_i32_1 : i32 to vector<32x1xi32>
    %8 = arith.cmpi slt, %4, %7 : vector<32x1xi32>
    %c0_i32_2 = arith.constant 0 : i32
    %9 = arith.cmpi slt, %2, %c0_i32_2 : i32
    %10 = vector.broadcast %9 : i1 to vector<32x1xi1>
    %11 = vector.broadcast %10 : vector<32x1xi1> to vector<32x1xi1>
    %12 = arith.xori %8, %11 : vector<32x1xi1>
    %13 = arith.andi %12, %6 : vector<32x1xi1>
    %14 = vector.broadcast %2 : i32 to vector<32x1xi32>
    %15 = arith.addi %4, %14 : vector<32x1xi32>
    %16 = arith.select %13, %15, %4 : vector<32x1xi1>, vector<32x1xi32>
    %c1_i32_3 = arith.constant 1 : i32
    %17 = vector.broadcast %c1_i32_3 : i32 to vector<32x1xi32>
    %18 = arith.cmpi sge, %16, %17 : vector<32x1xi32>
    %c14_i32 = arith.constant 14 : i32
    %19 = vector.broadcast %c14_i32 : i32 to vector<32x1xi32>
    %20 = arith.cmpi sle, %16, %19 : vector<32x1xi32>
    %c0 = arith.constant 0 : index
    %c0_4 = arith.constant 0 : index
    %21 = vector.load %arg3[%c0, %c0_4] : memref<128x128xbf16, #tpu.memory_space<vmem>>, vector<128x128xbf16>
    %22 = arith.extf %21 : vector<128x128xbf16> to vector<128x128xf32>
    %c0_5 = arith.constant 0 : index
    %c0_6 = arith.constant 0 : index
    %23 = vector.load %arg5[%c0_5, %c0_6] : memref<128x128xbf16, #tpu.memory_space<vmem>>, vector<128x128xbf16>
    %24 = arith.extf %23 : vector<128x128xbf16> to vector<128x128xf32>
    %c0_7 = arith.constant 0 : index
    %c0_8 = arith.constant 0 : index
    %25 = vector.load %arg4[%c0_7, %c0_8] : memref<4x128xf32, #tpu.memory_space<vmem>>, vector<4x128xf32>
    %c0_9 = arith.constant 0 : index
    %c0_10 = arith.constant 0 : index
    %26 = vector.load %arg0[%c0_9, %c0_10] : memref<32x64xf32, #tpu.memory_space<vmem>>, vector<32x64xf32>
    %c1_i32_11 = arith.constant 1 : i32
    %27 = tpu.dynamic_rotate %26 by %c1_i32_11 dim 0 : vector<32x64xf32>, i32 -> vector<32x64xf32>
    %cst = arith.constant 0.000000e+00 : f32
    %28 = vector.shape_cast %18 : vector<32x1xi1> to vector<32x1xi1>
    %29 = vector.broadcast %28 : vector<32x1xi1> to vector<32x64xi1>
    %30 = vector.broadcast %cst : f32 to vector<32x64xf32>
    %31 = arith.select %29, %27, %30 : vector<32x64xi1>, vector<32x64xf32>
    %c31_i32 = arith.constant 31 : i32
    %32 = tpu.dynamic_rotate %26 by %c31_i32 dim 0 : vector<32x64xf32>, i32 -> vector<32x64xf32>
    %cst_12 = arith.constant 0.000000e+00 : f32
    %33 = vector.shape_cast %20 : vector<32x1xi1> to vector<32x1xi1>
    %34 = vector.broadcast %33 : vector<32x1xi1> to vector<32x64xi1>
    %35 = vector.broadcast %cst_12 : f32 to vector<32x64xf32>
    %36 = arith.select %34, %32, %35 : vector<32x64xi1>, vector<32x64xf32>
    %c0_13 = arith.constant 0 : index
    %c0_14 = arith.constant 0 : index
    %c0_15 = arith.constant 0 : index
    %37 = vector.load %arg1[%c0_13, %c0_14, %c0_15] : memref<3x64x128xbf16, #tpu.memory_space<vmem>>, vector<1x64x128xbf16>
    %38 = vector.shape_cast %37 : vector<1x64x128xbf16> to vector<64x128xbf16>
    %39 = arith.extf %38 : vector<64x128xbf16> to vector<64x128xf32>
    %cst_16 = arith.constant dense<0.000000e+00> : vector<32x128xf32>
    %40 = tpu.matmul %31, %39, %cst_16 {dimension_numbers = #tpu.dot_dimension_numbers<[1], [0], [0], [1], [0, 0, 1, 1], [], []>} : vector<32x64xf32>, vector<64x128xf32>, vector<32x128xf32> -> vector<32x128xf32>
    %c1 = arith.constant 1 : index
    %c0_17 = arith.constant 0 : index
    %c0_18 = arith.constant 0 : index
    %41 = vector.load %arg1[%c1, %c0_17, %c0_18] : memref<3x64x128xbf16, #tpu.memory_space<vmem>>, vector<1x64x128xbf16>
    %42 = vector.shape_cast %41 : vector<1x64x128xbf16> to vector<64x128xbf16>
    %43 = arith.extf %42 : vector<64x128xbf16> to vector<64x128xf32>
    %cst_19 = arith.constant dense<0.000000e+00> : vector<32x128xf32>
    %44 = tpu.matmul %26, %43, %cst_19 {dimension_numbers = #tpu.dot_dimension_numbers<[1], [0], [0], [1], [0, 0, 1, 1], [], []>} : vector<32x64xf32>, vector<64x128xf32>, vector<32x128xf32> -> vector<32x128xf32>
    %45 = arith.addf %40, %44 : vector<32x128xf32>
    %c2 = arith.constant 2 : index
    %c0_20 = arith.constant 0 : index
    %c0_21 = arith.constant 0 : index
    %46 = vector.load %arg1[%c2, %c0_20, %c0_21] : memref<3x64x128xbf16, #tpu.memory_space<vmem>>, vector<1x64x128xbf16>
    %47 = vector.shape_cast %46 : vector<1x64x128xbf16> to vector<64x128xbf16>
    %48 = arith.extf %47 : vector<64x128xbf16> to vector<64x128xf32>
    %cst_22 = arith.constant dense<0.000000e+00> : vector<32x128xf32>
    %49 = tpu.matmul %36, %48, %cst_22 {dimension_numbers = #tpu.dot_dimension_numbers<[1], [0], [0], [1], [0, 0, 1, 1], [], []>} : vector<32x64xf32>, vector<64x128xf32>, vector<32x128xf32> -> vector<32x128xf32>
    %50 = arith.addf %45, %49 : vector<32x128xf32>
    %51 = vector.extract_strided_slice %25 {offsets = [0, 0], sizes = [1, 128], strides = [1, 1]} : vector<4x128xf32> to vector<1x128xf32>
    %52 = vector.extract_strided_slice %25 {offsets = [1, 0], sizes = [1, 128], strides = [1, 1]} : vector<4x128xf32> to vector<1x128xf32>
    %cst_23 = arith.constant dense<0.000000e+00> : vector<128xf32>
    %53 = vector.multi_reduction <add>, %50, %cst_23 [0] : vector<32x128xf32> to vector<128xf32>
    %54 = vector.shape_cast %53 : vector<128xf32> to vector<1x128xf32>
    %55 = arith.mulf %50, %50 : vector<32x128xf32>
    %cst_24 = arith.constant dense<0.000000e+00> : vector<128xf32>
    %56 = vector.multi_reduction <add>, %55, %cst_24 [0] : vector<32x128xf32> to vector<128xf32>
    %57 = vector.shape_cast %56 : vector<128xf32> to vector<1x128xf32>
    %58 = tpu.concatenate %54, %57 in 0 : vector<1x128xf32>, vector<1x128xf32> -> vector<2x128xf32>
    %cst_25 = arith.constant dense<0.000000e+00> : vector<2x128xf32>
    %59 = tpu.matmul %58, %22, %cst_25 {dimension_numbers = #tpu.dot_dimension_numbers<[1], [0], [0], [1], [0, 0, 1, 1], [], []>} : vector<2x128xf32>, vector<128x128xf32>, vector<2x128xf32> -> vector<2x128xf32>
    %60 = vector.extract_strided_slice %59 {offsets = [0, 0], sizes = [1, 128], strides = [1, 1]} : vector<2x128xf32> to vector<1x128xf32>
    %cst_26 = arith.constant 0.001953125 : f32
    %61 = vector.broadcast %cst_26 : f32 to vector<1x128xf32>
    %62 = arith.mulf %60, %61 : vector<1x128xf32>
    %63 = vector.extract_strided_slice %59 {offsets = [1, 0], sizes = [1, 128], strides = [1, 1]} : vector<2x128xf32> to vector<1x128xf32>
    %cst_27 = arith.constant 0.001953125 : f32
    %64 = vector.broadcast %cst_27 : f32 to vector<1x128xf32>
    %65 = arith.mulf %63, %64 : vector<1x128xf32>
    %66 = arith.mulf %62, %62 : vector<1x128xf32>
    %67 = arith.subf %65, %66 : vector<1x128xf32>
    %cst_28 = arith.constant 0.000000e+00 : f32
    %68 = vector.broadcast %cst_28 : f32 to vector<1x128xf32>
    %69 = arith.maximumf %67, %68 : vector<1x128xf32>
    %cst_29 = arith.constant 9.99999974E-6 : f32
    %70 = vector.broadcast %cst_29 : f32 to vector<1x128xf32>
    %71 = arith.addf %69, %70 : vector<1x128xf32>
    %72 = math.rsqrt %71 : vector<1x128xf32>
    %73 = arith.mulf %51, %72 : vector<1x128xf32>
    %74 = arith.mulf %62, %73 : vector<1x128xf32>
    %75 = arith.subf %52, %74 : vector<1x128xf32>
    %76 = vector.broadcast %73 : vector<1x128xf32> to vector<32x128xf32>
    %77 = arith.mulf %50, %76 : vector<32x128xf32>
    %78 = vector.broadcast %75 : vector<1x128xf32> to vector<32x128xf32>
    %79 = arith.addf %77, %78 : vector<32x128xf32>
    %cst_30 = arith.constant 0.000000e+00 : f32
    %80 = vector.broadcast %cst_30 : f32 to vector<32x128xf32>
    %81 = arith.maximumf %79, %80 : vector<32x128xf32>
    %c1_i32_31 = arith.constant 1 : i32
    %82 = tpu.dynamic_rotate %81 by %c1_i32_31 dim 0 : vector<32x128xf32>, i32 -> vector<32x128xf32>
    %cst_32 = arith.constant 0.000000e+00 : f32
    %83 = vector.shape_cast %18 : vector<32x1xi1> to vector<32x1xi1>
    %84 = vector.broadcast %83 : vector<32x1xi1> to vector<32x128xi1>
    %85 = vector.broadcast %cst_32 : f32 to vector<32x128xf32>
    %86 = arith.select %84, %82, %85 : vector<32x128xi1>, vector<32x128xf32>
    %c31_i32_33 = arith.constant 31 : i32
    %87 = tpu.dynamic_rotate %81 by %c31_i32_33 dim 0 : vector<32x128xf32>, i32 -> vector<32x128xf32>
    %cst_34 = arith.constant 0.000000e+00 : f32
    %88 = vector.shape_cast %20 : vector<32x1xi1> to vector<32x1xi1>
    %89 = vector.broadcast %88 : vector<32x1xi1> to vector<32x128xi1>
    %90 = vector.broadcast %cst_34 : f32 to vector<32x128xf32>
    %91 = arith.select %89, %87, %90 : vector<32x128xi1>, vector<32x128xf32>
    %c0_35 = arith.constant 0 : index
    %c0_36 = arith.constant 0 : index
    %c0_37 = arith.constant 0 : index
    %92 = vector.load %arg2[%c0_35, %c0_36, %c0_37] : memref<3x128x128xbf16, #tpu.memory_space<vmem>>, vector<1x128x128xbf16>
    %93 = vector.shape_cast %92 : vector<1x128x128xbf16> to vector<128x128xbf16>
    %94 = arith.extf %93 : vector<128x128xbf16> to vector<128x128xf32>
    %cst_38 = arith.constant dense<0.000000e+00> : vector<32x128xf32>
    %95 = tpu.matmul %86, %94, %cst_38 {dimension_numbers = #tpu.dot_dimension_numbers<[1], [0], [0], [1], [0, 0, 1, 1], [], []>} : vector<32x128xf32>, vector<128x128xf32>, vector<32x128xf32> -> vector<32x128xf32>
    %c1_39 = arith.constant 1 : index
    %c0_40 = arith.constant 0 : index
    %c0_41 = arith.constant 0 : index
    %96 = vector.load %arg2[%c1_39, %c0_40, %c0_41] : memref<3x128x128xbf16, #tpu.memory_space<vmem>>, vector<1x128x128xbf16>
    %97 = vector.shape_cast %96 : vector<1x128x128xbf16> to vector<128x128xbf16>
    %98 = arith.extf %97 : vector<128x128xbf16> to vector<128x128xf32>
    %cst_42 = arith.constant dense<0.000000e+00> : vector<32x128xf32>
    %99 = tpu.matmul %81, %98, %cst_42 {dimension_numbers = #tpu.dot_dimension_numbers<[1], [0], [0], [1], [0, 0, 1, 1], [], []>} : vector<32x128xf32>, vector<128x128xf32>, vector<32x128xf32> -> vector<32x128xf32>
    %100 = arith.addf %95, %99 : vector<32x128xf32>
    %c2_43 = arith.constant 2 : index
    %c0_44 = arith.constant 0 : index
    %c0_45 = arith.constant 0 : index
    %101 = vector.load %arg2[%c2_43, %c0_44, %c0_45] : memref<3x128x128xbf16, #tpu.memory_space<vmem>>, vector<1x128x128xbf16>
    %102 = vector.shape_cast %101 : vector<1x128x128xbf16> to vector<128x128xbf16>
    %103 = arith.extf %102 : vector<128x128xbf16> to vector<128x128xf32>
    %cst_46 = arith.constant dense<0.000000e+00> : vector<32x128xf32>
    %104 = tpu.matmul %91, %103, %cst_46 {dimension_numbers = #tpu.dot_dimension_numbers<[1], [0], [0], [1], [0, 0, 1, 1], [], []>} : vector<32x128xf32>, vector<128x128xf32>, vector<32x128xf32> -> vector<32x128xf32>
    %105 = arith.addf %100, %104 : vector<32x128xf32>
    %106 = vector.extract_strided_slice %25 {offsets = [2, 0], sizes = [1, 128], strides = [1, 1]} : vector<4x128xf32> to vector<1x128xf32>
    %107 = vector.extract_strided_slice %25 {offsets = [3, 0], sizes = [1, 128], strides = [1, 1]} : vector<4x128xf32> to vector<1x128xf32>
    %cst_47 = arith.constant dense<0.000000e+00> : vector<128xf32>
    %108 = vector.multi_reduction <add>, %105, %cst_47 [0] : vector<32x128xf32> to vector<128xf32>
    %109 = vector.shape_cast %108 : vector<128xf32> to vector<1x128xf32>
    %110 = arith.mulf %105, %105 : vector<32x128xf32>
    %cst_48 = arith.constant dense<0.000000e+00> : vector<128xf32>
    %111 = vector.multi_reduction <add>, %110, %cst_48 [0] : vector<32x128xf32> to vector<128xf32>
    %112 = vector.shape_cast %111 : vector<128xf32> to vector<1x128xf32>
    %113 = tpu.concatenate %109, %112 in 0 : vector<1x128xf32>, vector<1x128xf32> -> vector<2x128xf32>
    %cst_49 = arith.constant dense<0.000000e+00> : vector<2x128xf32>
    %114 = tpu.matmul %113, %22, %cst_49 {dimension_numbers = #tpu.dot_dimension_numbers<[1], [0], [0], [1], [0, 0, 1, 1], [], []>} : vector<2x128xf32>, vector<128x128xf32>, vector<2x128xf32> -> vector<2x128xf32>
    %115 = vector.extract_strided_slice %114 {offsets = [0, 0], sizes = [1, 128], strides = [1, 1]} : vector<2x128xf32> to vector<1x128xf32>
    %cst_50 = arith.constant 0.001953125 : f32
    %116 = vector.broadcast %cst_50 : f32 to vector<1x128xf32>
    %117 = arith.mulf %115, %116 : vector<1x128xf32>
    %118 = vector.extract_strided_slice %114 {offsets = [1, 0], sizes = [1, 128], strides = [1, 1]} : vector<2x128xf32> to vector<1x128xf32>
    %cst_51 = arith.constant 0.001953125 : f32
    %119 = vector.broadcast %cst_51 : f32 to vector<1x128xf32>
    %120 = arith.mulf %118, %119 : vector<1x128xf32>
    %121 = arith.mulf %117, %117 : vector<1x128xf32>
    %122 = arith.subf %120, %121 : vector<1x128xf32>
    %cst_52 = arith.constant 0.000000e+00 : f32
    %123 = vector.broadcast %cst_52 : f32 to vector<1x128xf32>
    %124 = arith.maximumf %122, %123 : vector<1x128xf32>
    %cst_53 = arith.constant 9.99999974E-6 : f32
    %125 = vector.broadcast %cst_53 : f32 to vector<1x128xf32>
    %126 = arith.addf %124, %125 : vector<1x128xf32>
    %127 = math.rsqrt %126 : vector<1x128xf32>
    %128 = arith.mulf %106, %127 : vector<1x128xf32>
    %129 = arith.mulf %117, %128 : vector<1x128xf32>
    %130 = arith.subf %107, %129 : vector<1x128xf32>
    %131 = vector.broadcast %128 : vector<1x128xf32> to vector<32x128xf32>
    %132 = arith.mulf %105, %131 : vector<32x128xf32>
    %133 = vector.broadcast %130 : vector<1x128xf32> to vector<32x128xf32>
    %134 = arith.addf %132, %133 : vector<32x128xf32>
    %cst_54 = arith.constant 0.000000e+00 : f32
    %135 = vector.broadcast %cst_54 : f32 to vector<32x128xf32>
    %136 = arith.maximumf %134, %135 : vector<32x128xf32>
    %c0_55 = arith.constant 0 : index
    %c0_56 = arith.constant 0 : index
    %137 = vector.load %arg6[%c0_55, %c0_56] : memref<32x128xf32, #tpu.memory_space<vmem>>, vector<32x128xf32>
    tpu.vector_store %arg6[%c0_55, %c0_56], %136 {strides = array<i32>} : memref<32x128xf32, #tpu.memory_space<vmem>>, vector<32x128xf32>,
    %c0_57 = arith.constant 0 : index
    %c0_58 = arith.constant 0 : index
    %138 = tpu.strided_load %arg6[%c0_57, %c0_58] {strides = array<i32: 2, 1>} : memref<32x128xf32, #tpu.memory_space<vmem>>, vector<16x128xf32>
    %c1_59 = arith.constant 1 : index
    %c0_60 = arith.constant 0 : index
    %139 = tpu.strided_load %arg6[%c1_59, %c0_60] {strides = array<i32: 2, 1>} : memref<32x128xf32, #tpu.memory_space<vmem>>, vector<16x128xf32>
    %140 = arith.maximumf %138, %139 : vector<16x128xf32>
    %c120_i32 = arith.constant 120 : i32
    %141 = tpu.dynamic_rotate %140 by %c120_i32 dim 1 : vector<16x128xf32>, i32 -> vector<16x128xf32>
    %142 = arith.maximumf %140, %141 : vector<16x128xf32>
    %cst_61 = arith.constant dense<0.000000e+00> : vector<16x128xf32>
    %143 = tpu.matmul %142, %24, %cst_61 {dimension_numbers = #tpu.dot_dimension_numbers<[1], [0], [0], [1], [0, 0, 1, 1], [], []>} : vector<16x128xf32>, vector<128x128xf32>, vector<16x128xf32> -> vector<16x128xf32>
    %c0_62 = arith.constant 0 : index
    %c0_63 = arith.constant 0 : index
    %144 = vector.load %arg7[%c0_62, %c0_63] : memref<16x128xf32, #tpu.memory_space<vmem>>, vector<16x128xf32>
    tpu.vector_store %arg7[%c0_62, %c0_63], %143 {strides = array<i32>} : memref<16x128xf32, #tpu.memory_space<vmem>>, vector<16x128xf32>,
    return
  }
}

</mosaic_0001>

<llo_original>
// kernel: tile.23
$region0: #{tile.23}
  #allocation0 [shape = 's32[1]{0}', space=sflag, size = 0x4, scoped, tag = 'scoped memory for tile.23']
  %s0 = inlined_call_operand.vmem [shape: f32[8], index: 0, kind: input, shape index: {}]
  %s1 = inlined_call_operand.vmem [shape: f32[16,8], index: 1, kind: output, shape index: {}]
  // Predicated region
  $region2: #{tile.23} parent=0 // pred_check
    _
  $region3: #{tile.23} parent=0 // pred_check_branch
    %3 = sbr.rel (0) target = $region5
  $region4: #{tile.23} parent=0 // pred_region
    _
  $region5: #{tile.23} parent=0 // pred_fallthru
    _
  %v4 = vld [vmem:[%s0] ss:$0 sm:$0xff]
  %5 = vst [vmem:[%s1] sm:$0xff] %v4
  %s6 = scalar_lea.vmem %s1, 8
  %7 = vst [vmem:[%s6] sm:$0xff] %v4

// kernel: tile.36
$region0: #{tile.36}
  %s0 = inlined_call_operand.vmem [shape: f32[16,8], index: 0, kind: input, shape index: {}]
  %s1 = inlined_call_operand.vmem [shape: f32[1,128], index: 1, kind: output, shape index: {}]
  $region1: #{tile.36} parent=0
    #allocation0 [shape = 'u8[4096]{0}', space=vmem, size = 0x1000, scoped, tag = 'scoped mem for output reshape']
    %v2 = vld [vmem:[%s0] sm:$0x1]
    %vm3 = vcmask 64512
    %4 = vst.msk [vmem:[#allocation0] sm:$0x1] %vm3, %v2
    %s5 = scalar_lea.vmem %s0, 15
    %v6 = vld [vmem:[%s5] sm:$0x1]
    %7 = vrot.lane.b32.xlu0 %v6, 120
    %v8 = vpop.permute.xlu0 %7
    %vm9 = vcmask 1048512
    %10 = vst.msk [vmem:[#allocation0] sm:$0x1] %vm9, %v8
    %s11 = scalar_lea.vmem %s0, 14
    %v12 = vld [vmem:[%s11] sm:$0x1]
    %13 = vrot.lane.b32.xlu0 %v12, 112
    %v14 = vpop.permute.xlu0 %13
    %vm15 = vcmask 982912
    %16 = vst.msk [vmem:[#allocation0] sm:$0x1] %vm15, %v14
    %s17 = scalar_lea.vmem %s0, 13
    %v18 = vld [vmem:[%s17] sm:$0x1]
    %19 = vrot.lane.b32.xlu0 %v18, 104
    %v20 = vpop.permute.xlu0 %19
    %vm21 = vcmask 917312
    %22 = vst.msk [vmem:[#allocation0] sm:$0x1] %vm21, %v20
    %s23 = scalar_lea.vmem %s0, 12
    %v24 = vld [vmem:[%s23] sm:$0x1]
    %25 = vrot.lane.b32.xlu0 %v24, 96
    %v26 = vpop.permute.xlu0 %25
    %vm27 = vcmask 851712
    %28 = vst.msk [vmem:[#allocation0] sm:$0x1] %vm27, %v26
    %s29 = scalar_lea.vmem %s0, 11
    %v30 = vld [vmem:[%s29] sm:$0x1]
    %31 = vrot.lane.b32.xlu0 %v30, 88
    %v32 = vpop.permute.xlu0 %31
    %vm33 = vcmask 786112
    %34 = vst.msk [vmem:[#allocation0] sm:$0x1] %vm33, %v32
    %s35 = scalar_lea.vmem %s0, 10
    %v36 = vld [vmem:[%s35] sm:$0x1]
    %37 = vrot.lane.b32.xlu0 %v36, 80
    %v38 = vpop.permute.xlu0 %37
    %vm39 = vcmask 720512
    %40 = vst.msk [vmem:[#allocation0] sm:$0x1] %vm39, %v38
    %s41 = scalar_lea.vmem %s0, 9
    %v42 = vld [vmem:[%s41] sm:$0x1]
    %43 = vrot.lane.b32.xlu0 %v42, 72
    %v44 = vpop.permute.xlu0 %43
    %vm45 = vcmask 654912
    %46 = vst.msk [vmem:[#allocation0] sm:$0x1] %vm45, %v44
    %s47 = scalar_lea.vmem %s0, 8
    %v48 = vld [vmem:[%s47] sm:$0x1]
    %49 = vrot.lane.b32.xlu0 %v48, 64
    %v50 = vpop.permute.xlu0 %49
    %vm51 = vcmask 589312
    %52 = vst.msk [vmem:[#allocation0] sm:$0x1] %vm51, %v50
    %s53 = scalar_lea.vmem %s0, 7
    %v54 = vld [vmem:[%s53] sm:$0x1]
    %55 = vrot.lane.b32.xlu0 %v54, 56
    %v56 = vpop.permute.xlu0 %55
    %vm57 = vcmask 523712
    %58 = vst.msk [vmem:[#allocation0] sm:$0x1] %vm57, %v56
    %s59 = scalar_lea.vmem %s0, 6
    %v60 = vld [vmem:[%s59] sm:$0x1]
    %61 = vrot.lane.b32.xlu0 %v60, 48
    %v62 = vpop.permute.xlu0 %61
    %vm63 = vcmask 458112
    %64 = vst.msk [vmem:[#allocation0] sm:$0x1] %vm63, %v62
    %s65 = scalar_lea.vmem %s0, 5
    %v66 = vld [vmem:[%s65] sm:$0x1]
    %67 = vrot.lane.b32.xlu0 %v66, 40
    %v68 = vpop.permute.xlu0 %67
    %vm69 = vcmask 392512
    %70 = vst.msk [vmem:[#allocation0] sm:$0x1] %vm69, %v68
    %s71 = scalar_lea.vmem %s0, 4
    %v72 = vld [vmem:[%s71] sm:$0x1]
    %73 = vrot.lane.b32.xlu0 %v72, 32
    %v74 = vpop.permute.xlu0 %73
    %vm75 = vcmask 326912
    %76 = vst.msk [vmem:[#allocation0] sm:$0x1] %vm75, %v74
    %s77 = scalar_lea.vmem %s0, 3
    %v78 = vld [vmem:[%s77] sm:$0x1]
    %79 = vrot.lane.b32.xlu0 %v78, 24
    %v80 = vpop.permute.xlu0 %79
    %vm81 = vcmask 261312
    %82 = vst.msk [vmem:[#allocation0] sm:$0x1] %vm81, %v80
    %s83 = scalar_lea.vmem %s0, 2
    %v84 = vld [vmem:[%s83] sm:$0x1]
    %85 = vrot.lane.b32.xlu0 %v84, 16
    %v86 = vpop.permute.xlu0 %85
    %vm87 = vcmask 195712
    %88 = vst.msk [vmem:[#allocation0] sm:$0x1] %vm87, %v86
    %s89 = scalar_lea.vmem %s0, 1
    %v90 = vld [vmem:[%s89] sm:$0x1]
    %91 = vrot.lane.b32.xlu0 %v90, 8
    %v92 = vpop.permute.xlu0 %91
    %vm93 = vcmask 130112
    %94 = vst.msk [vmem:[#allocation0] sm:$0x1] %vm93, %v92
    %s96 = sshllo.u32 0, 1
    %v98 = vld [vmem:[#allocation0] sm:%s96]
    %s99 = sshllo.u32 0, 1
    %100 = vst [vmem:[%s1] sm:%s99] %v98

// kernel: downsample_block_forward.1
$region0: #{downsample_block_forward.1}
  #allocation0 [shape = 'u32[]', space=smem, size = 0x4, offset = 0x4, fixed_abs, tag = 'smem constant byte address 0x4 - core index']
  #allocation1 [shape = 'u32[144,128]{1,0:T(1,128)}', space=vmem, size = 0x12000, scoped, tag = 'internal scratch']
  %s0 = inlined_call_operand.vmem [shape: f32[32,64], index: 0, kind: input, shape index: {}]
  %s1 = inlined_call_operand.vmem [shape: bf16[3,64,128], index: 1, kind: input, shape index: {}]
  %s2 = inlined_call_operand.vmem [shape: bf16[3,128,128], index: 2, kind: input, shape index: {}]
  %s3 = inlined_call_operand.vmem [shape: bf16[128,128], index: 3, kind: input, shape index: {}]
  %s4 = inlined_call_operand.vmem [shape: f32[4,128], index: 4, kind: input, shape index: {}]
  %s5 = inlined_call_operand.vmem [shape: bf16[128,128], index: 5, kind: input, shape index: {}]
  %s6 = inlined_call_operand.vmem [shape: f32[32,128], index: 6, kind: output, shape index: {0}]
  %s7 = inlined_call_operand.vmem [shape: f32[16,128], index: 7, kind: output, shape index: {1}]
  %8 = xla_tuple %s6, %s7
  %s9 = sld [smem:[#allocation0]]
  $region42: #{downsample_block_forward.1} parent=0
    _
  %s11 = ssub.s32 1, %s9
  %s12 = scalar_select 0, %s11, %s9
  // Predicated region
  $region2: #{downsample_block_forward.1} parent=0 // pred_check
    _
  $region3: #{downsample_block_forward.1} parent=0 // pred_check_branch
    %14 = sbr.rel (0) target = $region5
  $region4: #{downsample_block_forward.1} parent=0 // pred_region
    _
  $region5: #{downsample_block_forward.1} parent=0 // pred_fallthru
    _
  // Predicated region
  $region6: #{downsample_block_forward.1} parent=0 // pred_check
    _
  $region7: #{downsample_block_forward.1} parent=0 // pred_check_branch
    %16 = sbr.rel (0) target = $region9
  $region8: #{downsample_block_forward.1} parent=0 // pred_region
    _
  $region9: #{downsample_block_forward.1} parent=0 // pred_fallthru
    _
  // Predicated region
  $region10: #{downsample_block_forward.1} parent=0 // pred_check
    _
  $region11: #{downsample_block_forward.1} parent=0 // pred_check_branch
    %18 = sbr.rel (0) target = $region13
  $region12: #{downsample_block_forward.1} parent=0 // pred_region
    _
  $region13: #{downsample_block_forward.1} parent=0 // pred_fallthru
    _
  // Predicated region
  $region14: #{downsample_block_forward.1} parent=0 // pred_check
    _
  $region15: #{downsample_block_forward.1} parent=0 // pred_check_branch
    %20 = sbr.rel (0) target = $region17
  $region16: #{downsample_block_forward.1} parent=0 // pred_region
    _
  $region17: #{downsample_block_forward.1} parent=0 // pred_fallthru
    _
  // Predicated region
  $region18: #{downsample_block_forward.1} parent=0 // pred_check
    _
  $region19: #{downsample_block_forward.1} parent=0 // pred_check_branch
    %22 = sbr.rel (0) target = $region21
  $region20: #{downsample_block_forward.1} parent=0 // pred_region
    _
  $region21: #{downsample_block_forward.1} parent=0 // pred_fallthru
    _
  // Predicated region
  $region22: #{downsample_block_forward.1} parent=0 // pred_check
    _
  $region23: #{downsample_block_forward.1} parent=0 // pred_check_branch
    %24 = sbr.rel (0) target = $region25
  $region24: #{downsample_block_forward.1} parent=0 // pred_region
    _
  $region25: #{downsample_block_forward.1} parent=0 // pred_fallthru
    _
  %v25 = vlaneseq
  %v26 = vshrl.u32 %v25, 7
  %v27 = vadd.s32 %v26, 8
  %v28 = vadd.s32 %v26, 16
  %v29 = vadd.s32 %v26, 24
  %vm30 = vcmp.lt.s32.totalorder %v26, 0
  %v31 = vsub.s32 0, %v26
  %v32 = vsel %vm30, %v31, %v26
  %v33 = vshrl.u32 %v32, 4
  %v34 = vand.u32 %v32, 15
  %v35 = vsub.s32 0, %v34
  %v36 = vsel %vm30, %v35, %v34
  %vm37 = vcmp.lt.s32.totalorder %v27, 0
  %v38 = vsub.s32 0, %v27
  %v39 = vsel %vm37, %v38, %v27
  %v40 = vshrl.u32 %v39, 4
  %v41 = vand.u32 %v39, 15
  %v42 = vsub.s32 0, %v41
  %v43 = vsel %vm37, %v42, %v41
  %vm44 = vcmp.lt.s32.totalorder %v28, 0
  %v45 = vsub.s32 0, %v28
  %v46 = vsel %vm44, %v45, %v28
  %v47 = vshrl.u32 %v46, 4
  %v48 = vand.u32 %v46, 15
  %v49 = vsub.s32 0, %v48
  %v50 = vsel %vm44, %v49, %v48
  %vm51 = vcmp.lt.s32.totalorder %v29, 0
  %v52 = vsub.s32 0, %v29
  %v53 = vsel %vm51, %v52, %v29
  %v54 = vshrl.u32 %v53, 4
  %v55 = vand.u32 %v53, 15
  %v56 = vsub.s32 0, %v55
  %v57 = vsel %vm51, %v56, %v55
  %vm58 = vcmp.ne.s32.totalorder %v36, 0
  %vm59 = vcmp.ne.s32.totalorder %v43, 0
  %vm60 = vcmp.ne.s32.totalorder %v50, 0
  %vm61 = vcmp.ne.s32.totalorder %v57, 0
  %vm62 = vcmp.lt.s32.totalorder %v36, 0
  %vm63 = vcmp.lt.s32.totalorder %v43, 0
  %vm64 = vcmp.lt.s32.totalorder %v50, 0
  %vm65 = vcmp.lt.s32.totalorder %v57, 0
  %vm66 = vmand %vm62, %vm58
  %vm67 = vmand %vm63, %vm59
  %vm68 = vmand %vm64, %vm60
  %vm69 = vmand %vm65, %vm61
  %v70 = vadd.s32 %v36, 16
  %v71 = vadd.s32 %v43, 16
  %v72 = vadd.s32 %v50, 16
  %v73 = vadd.s32 %v57, 16
  %v74 = vsel %vm66, %v70, %v36
  %v75 = vsel %vm67, %v71, %v43
  %v76 = vsel %vm68, %v72, %v50
  %v77 = vsel %vm69, %v73, %v57
  %vm78 = vcmp.ge.s32.totalorder %v74, 1
  %vm79 = vcmp.ge.s32.totalorder %v75, 1
  %vm80 = vcmp.ge.s32.totalorder %v76, 1
  %vm81 = vcmp.ge.s32.totalorder %v77, 1
  %vm82 = vcmp.le.s32.totalorder %v74, 14
  %vm83 = vcmp.le.s32.totalorder %v75, 14
  %vm84 = vcmp.le.s32.totalorder %v76, 14
  %vm85 = vcmp.le.s32.totalorder %v77, 14
  %v86 = vld [vmem:[%s3] sm:$0xf]
  %v87 = vld [vmem:[%s3 + $0x4] sm:$0xf]
  %v88 = vld [vmem:[%s3 + $0x8] sm:$0xf]
  %v89 = vld [vmem:[%s3 + $0xc] sm:$0xf]
  %v90 = vld [vmem:[%s3 + $0x10] sm:$0xf]
  %v91 = vld [vmem:[%s3 + $0x14] sm:$0xf]
  %v92 = vld [vmem:[%s3 + $0x18] sm:$0xf]
  %v93 = vld [vmem:[%s3 + $0x1c] sm:$0xf]
  %v94 = vld [vmem:[%s3 + $0x20] sm:$0xf]
  %v95 = vld [vmem:[%s3 + $0x24] sm:$0xf]
  %v96 = vld [vmem:[%s3 + $0x28] sm:$0xf]
  %v97 = vld [vmem:[%s3 + $0x2c] sm:$0xf]
  %v98 = vld [vmem:[%s3 + $0x30] sm:$0xf]
  %v99 = vld [vmem:[%s3 + $0x34] sm:$0xf]
  %v100 = vld [vmem:[%s3 + $0x38] sm:$0xf]
  %v101 = vld [vmem:[%s3 + $0x3c] sm:$0xf]
  %v102 = vunpack.c.l.bf16 %v86
  %v103 = vunpack.c.l.bf16 %v87
  %v104 = vunpack.c.l.bf16 %v88
  %v105 = vunpack.c.l.bf16 %v89
  %v106 = vunpack.c.l.bf16 %v90
  %v107 = vunpack.c.l.bf16 %v91
  %v108 = vunpack.c.l.bf16 %v92
  %v109 = vunpack.c.l.bf16 %v93
  %v110 = vunpack.c.l.bf16 %v94
  %v111 = vunpack.c.l.bf16 %v95
  %v112 = vunpack.c.l.bf16 %v96
  %v113 = vunpack.c.l.bf16 %v97
  %v114 = vunpack.c.l.bf16 %v98
  %v115 = vunpack.c.l.bf16 %v99
  %v116 = vunpack.c.l.bf16 %v100
  %v117 = vunpack.c.l.bf16 %v101
  %v118 = vld [vmem:[%s5] sm:$0xf]
  %v119 = vld [vmem:[%s5 + $0x4] sm:$0xf]
  %v120 = vld [vmem:[%s5 + $0x8] sm:$0xf]
  %v121 = vld [vmem:[%s5 + $0xc] sm:$0xf]
  %v122 = vld [vmem:[%s5 + $0x10] sm:$0xf]
  %v123 = vld [vmem:[%s5 + $0x14] sm:$0xf]
  %v124 = vld [vmem:[%s5 + $0x18] sm:$0xf]
  %v125 = vld [vmem:[%s5 + $0x1c] sm:$0xf]
  %v126 = vld [vmem:[%s5 + $0x20] sm:$0xf]
  %v127 = vld [vmem:[%s5 + $0x24] sm:$0xf]
  %v128 = vld [vmem:[%s5 + $0x28] sm:$0xf]
  %v129 = vld [vmem:[%s5 + $0x2c] sm:$0xf]
  %v130 = vld [vmem:[%s5 + $0x30] sm:$0xf]
  %v131 = vld [vmem:[%s5 + $0x34] sm:$0xf]
  %v132 = vld [vmem:[%s5 + $0x38] sm:$0xf]
  %v133 = vld [vmem:[%s5 + $0x3c] sm:$0xf]
  %v134 = vunpack.c.l.bf16 %v118
  %v135 = vunpack.c.l.bf16 %v119
  %v136 = vunpack.c.l.bf16 %v120
  %v137 = vunpack.c.l.bf16 %v121
  %v138 = vunpack.c.l.bf16 %v122
  %v139 = vunpack.c.l.bf16 %v123
  %v140 = vunpack.c.l.bf16 %v124
  %v141 = vunpack.c.l.bf16 %v125
  %v142 = vunpack.c.l.bf16 %v126
  %v143 = vunpack.c.l.bf16 %v127
  %v144 = vunpack.c.l.bf16 %v128
  %v145 = vunpack.c.l.bf16 %v129
  %v146 = vunpack.c.l.bf16 %v130
  %v147 = vunpack.c.l.bf16 %v131
  %v148 = vunpack.c.l.bf16 %v132
  %v149 = vunpack.c.l.bf16 %v133
  %v150 = vld [vmem:[%s4] sm:$0xf]
  %v151 = vld [vmem:[%s0] sm:$0xff]
  %v152 = vld [vmem:[%s0 + $0x8] sm:$0xff]
  %v153 = vld [vmem:[%s0 + $0x10] sm:$0xff]
  %v154 = vld [vmem:[%s0 + $0x18] sm:$0xff]
  %v155 = vrot.slane %v151, 7
  %v156 = vrot.slane %v152, 7
  %v157 = vrot.slane %v153, 7
  %v158 = vrot.slane %v154, 7
  %vm159 = vcmp.lt.s32.totalorder %v26, 1
  %v160 = vsel %vm159, %v157, %v158
  %v161 = vsel %vm159, %v156, %v157
  %v162 = vsel %vm159, %v155, %v156
  %v163 = vsel %vm159, %v158, %v155
  %v164 = vsel %vm78, 1, 0
  %v165 = vsel %vm79, 1, 0
  %v166 = vsel %vm80, 1, 0
  %v167 = vsel %vm81, 1, 0
  %vm168 = vcmp.eq.s32.totalorder %v164, 1
  %vm169 = vcmp.eq.s32.totalorder %v165, 1
  %vm170 = vcmp.eq.s32.totalorder %v166, 1
  %vm171 = vcmp.eq.s32.totalorder %v167, 1
  %v172 = vsel %vm168, %v163, 0.0
  %v173 = vsel %vm169, %v162, 0.0
  %v174 = vsel %vm170, %v161, 0.0
  %v175 = vsel %vm171, %v160, 0.0
  %v176 = vrot.slane %v151, 1
  %v177 = vrot.slane %v152, 1
  %v178 = vrot.slane %v153, 1
  %v179 = vrot.slane %v154, 1
  %vm180 = vcmp.lt.s32.totalorder %v26, 7
  %v181 = vsel %vm180, %v178, %v179
  %v182 = vsel %vm180, %v177, %v178
  %v183 = vsel %vm180, %v176, %v177
  %v184 = vsel %vm180, %v179, %v176
  %v185 = vsel %vm82, 1, 0
  %v186 = vsel %vm83, 1, 0
  %v187 = vsel %vm84, 1, 0
  %v188 = vsel %vm85, 1, 0
  %vm189 = vcmp.eq.s32.totalorder %v185, 1
  %vm190 = vcmp.eq.s32.totalorder %v186, 1
  %vm191 = vcmp.eq.s32.totalorder %v187, 1
  %vm192 = vcmp.eq.s32.totalorder %v188, 1
  %v193 = vsel %vm189, %v183, 0.0
  %v194 = vsel %vm190, %v182, 0.0
  %v195 = vsel %vm191, %v181, 0.0
  %v196 = vsel %vm192, %v184, 0.0
  %v197 = vld [vmem:[%s1] sm:$0xf]
  %v198 = vld [vmem:[%s1 + $0x4] sm:$0xf]
  %v199 = vld [vmem:[%s1 + $0x8] sm:$0xf]
  %v200 = vld [vmem:[%s1 + $0xc] sm:$0xf]
  %v201 = vld [vmem:[%s1 + $0x10] sm:$0xf]
  %v202 = vld [vmem:[%s1 + $0x14] sm:$0xf]
  %v203 = vld [vmem:[%s1 + $0x18] sm:$0xf]
  %v204 = vld [vmem:[%s1 + $0x1c] sm:$0xf]
  %v205 = vunpack.c.l.bf16 %v197
  %v206 = vunpack.c.l.bf16 %v198
  %v207 = vunpack.c.l.bf16 %v199
  %v208 = vunpack.c.l.bf16 %v200
  %v209 = vunpack.c.l.bf16 %v201
  %v210 = vunpack.c.l.bf16 %v202
  %v211 = vunpack.c.l.bf16 %v203
  %v212 = vunpack.c.l.bf16 %v204
  %s213 = scalar_lea.vmem %s1, 32
  %v214 = vld [vmem:[%s213] sm:$0xf]
  %v215 = vld [vmem:[%s213 + $0x4] sm:$0xf]
  %v216 = vld [vmem:[%s213 + $0x8] sm:$0xf]
  %v217 = vld [vmem:[%s213 + $0xc] sm:$0xf]
  %v218 = vld [vmem:[%s213 + $0x10] sm:$0xf]
  %v219 = vld [vmem:[%s213 + $0x14] sm:$0xf]
  %v220 = vld [vmem:[%s213 + $0x18] sm:$0xf]
  %v221 = vld [vmem:[%s213 + $0x1c] sm:$0xf]
  %v222 = vunpack.c.l.bf16 %v214
  %v223 = vunpack.c.l.bf16 %v215
  %v224 = vunpack.c.l.bf16 %v216
  %v225 = vunpack.c.l.bf16 %v217
  %v226 = vunpack.c.l.bf16 %v218
  %v227 = vunpack.c.l.bf16 %v219
  %v228 = vunpack.c.l.bf16 %v220
  %v229 = vunpack.c.l.bf16 %v221
  %vm230 = vcmask 523264
  %v232 = vsel %vm230, %v151, 0
  %v235 = vsel %vm230, %v152, 0
  %v238 = vsel %vm230, %v153, 0
  %v241 = vsel %vm230, %v154, 0
  %243 = vmatprep.subr.mxu0 0.0
  %244 = vmatpush1.msra.mxu0 %v222
  %245 = vmatprep.subr.mxu0 0.0
  %246 = vmatpush1.msra.mxu0 %v223
  %247 = vmatprep.subr.mxu0 0.0
  %248 = vmatpush1.msra.mxu0 %v224
  %249 = vmatprep.subr.mxu0 0.0
  %250 = vmatpush1.msra.mxu0 %v225
  %251 = vmatprep.subr.mxu0 0.0
  %252 = vmatpush1.msra.mxu0 %v226
  %253 = vmatprep.subr.mxu0 0.0
  %254 = vmatpush1.msra.mxu0 %v227
  %255 = vmatprep.subr.mxu0 0.0
  %256 = vmatpush1.msra.mxu0 %v228
  %257 = vmatprep.subr.mxu0 0.0
  %258 = vmatpush1.msra.mxu0 %v229
  %259 = vmatprep.subr.mxu0 0.0
  %260 = vmatpush1.msra.mxu0 0.0
  %261 = vmatprep.subr.mxu0 0.0
  %262 = vmatpush1.msra.mxu0 0.0
  %263 = vmatprep.subr.mxu0 0.0
  %264 = vmatpush1.msra.mxu0 0.0
  %265 = vmatprep.subr.mxu0 0.0
  %266 = vmatpush1.msra.mxu0 0.0
  %267 = vmatprep.subr.mxu0 0.0
  %268 = vmatpush1.msra.mxu0 0.0
  %269 = vmatprep.subr.mxu0 0.0
  %270 = vmatpush1.msra.mxu0 0.0
  %271 = vmatprep.subr.mxu0 0.0
  %272 = vmatpush1.msra.mxu0 0.0
  %273 = vmatprep.subr.mxu0 0.0
  %274 = vmatpush1.msra.mxu0 0.0
  %275 = vmatprep.subr.mxu0 0.0
  %276 = vmatpush1.msra.mxu0 0.0
  %277 = vmatprep.subr.mxu0 0.0
  %278 = vmatpush1.msra.mxu0 0.0
  %279 = vmatprep.subr.mxu0 0.0
  %280 = vmatpush1.msra.mxu0 0.0
  %281 = vmatprep.subr.mxu0 0.0
  %282 = vmatpush1.msra.mxu0 0.0
  %283 = vmatprep.subr.mxu0 0.0
  %284 = vmatpush1.msra.mxu0 0.0
  %285 = vmatprep.subr.mxu0 0.0
  %286 = vmatpush1.msra.mxu0 0.0
  %287 = vmatprep.subr.mxu0 0.0
  %288 = vmatpush1.msra.mxu0 0.0
  %289 = vmatprep.subr.mxu0 0.0
  %290 = vmatpush1.msra.mxu0 0.0
  %291 = vmatprep.subr.mxu0 0.0
  %292 = vmatpush1.msra.mxu0 0.0
  %293 = vmatprep.subr.mxu0 0.0
  %294 = vmatpush1.msra.mxu0 0.0
  %295 = vmatprep.subr.mxu0 0.0
  %296 = vmatpush1.msra.mxu0 0.0
  %297 = vmatprep.subr.mxu0 0.0
  %298 = vmatpush1.msra.mxu0 0.0
  %299 = vmatprep.subr.mxu0 0.0
  %300 = vmatpush1.msra.mxu0 0.0
  %301 = vmatprep.subr.mxu0 0.0
  %302 = vmatpush1.msra.mxu0 0.0
  %303 = vmatprep.subr.mxu0 0.0
  %304 = vmatpush1.msra.mxu0 0.0
  %305 = vmatprep.subr.mxu0 0.0
  %306 = vmatpush1.msra.mxu0 0.0
  %307 = vmatprep.mubr.f32.mxu0 0.0
  %308 = vmatmul.mubr.f32.gmra.mrb[0].mxu0 %v232
  %v309 = vpop.f32.mrb[0].mxu0
  %v310 = vadd.f32 0.0, %v309
  %v311 = vpop.f32.mrb[0].mxu0
  %312 = vmatprep.mubr.f32.mxu0 0.0
  %313 = vmatmul.mubr.f32.gmra.mrb[0].mxu0 %v235
  %v314 = vpop.f32.mrb[0].mxu0
  %v315 = vadd.f32 0.0, %v314
  %v316 = vpop.f32.mrb[0].mxu0
  %317 = vmatprep.mubr.f32.mxu0 0.0
  %318 = vmatmul.mubr.f32.gmra.mrb[0].mxu0 %v238
  %v319 = vpop.f32.mrb[0].mxu0
  %v320 = vadd.f32 0.0, %v319
  %v321 = vpop.f32.mrb[0].mxu0
  %322 = vmatprep.mubr.f32.mxu0 0.0
  %323 = vmatmul.mubr.f32.gmra.mrb[0].mxu0 %v241
  %v324 = vpop.f32.mrb[0].mxu0
  %v325 = vadd.f32 0.0, %v324
  %v326 = vpop.f32.mrb[0].mxu0
  %327 = vdwg.mxu0
  %v329 = vsel %vm230, %v172, 0
  %v332 = vsel %vm230, %v173, 0
  %v335 = vsel %vm230, %v174, 0
  %v338 = vsel %vm230, %v175, 0
  %340 = vmatprep.subr.mxu0 0.0
  %341 = vmatpush1.msra.mxu0 %v205
  %342 = vmatprep.subr.mxu0 0.0
  %343 = vmatpush1.msra.mxu0 %v206
  %344 = vmatprep.subr.mxu0 0.0
  %345 = vmatpush1.msra.mxu0 %v207
  %346 = vmatprep.subr.mxu0 0.0
  %347 = vmatpush1.msra.mxu0 %v208
  %348 = vmatprep.subr.mxu0 0.0
  %349 = vmatpush1.msra.mxu0 %v209
  %350 = vmatprep.subr.mxu0 0.0
  %351 = vmatpush1.msra.mxu0 %v210
  %352 = vmatprep.subr.mxu0 0.0
  %353 = vmatpush1.msra.mxu0 %v211
  %354 = vmatprep.subr.mxu0 0.0
  %355 = vmatpush1.msra.mxu0 %v212
  %356 = vmatprep.subr.mxu0 0.0
  %357 = vmatpush1.msra.mxu0 0.0
  %358 = vmatprep.subr.mxu0 0.0
  %359 = vmatpush1.msra.mxu0 0.0
  %360 = vmatprep.subr.mxu0 0.0
  %361 = vmatpush1.msra.mxu0 0.0
  %362 = vmatprep.subr.mxu0 0.0
  %363 = vmatpush1.msra.mxu0 0.0
  %364 = vmatprep.subr.mxu0 0.0
  %365 = vmatpush1.msra.mxu0 0.0
  %366 = vmatprep.subr.mxu0 0.0
  %367 = vmatpush1.msra.mxu0 0.0
  %368 = vmatprep.subr.mxu0 0.0
  %369 = vmatpush1.msra.mxu0 0.0
  %370 = vmatprep.subr.mxu0 0.0
  %371 = vmatpush1.msra.mxu0 0.0
  %372 = vmatprep.subr.mxu0 0.0
  %373 = vmatpush1.msra.mxu0 0.0
  %374 = vmatprep.subr.mxu0 0.0
  %375 = vmatpush1.msra.mxu0 0.0
  %376 = vmatprep.subr.mxu0 0.0
  %377 = vmatpush1.msra.mxu0 0.0
  %378 = vmatprep.subr.mxu0 0.0
  %379 = vmatpush1.msra.mxu0 0.0
  %380 = vmatprep.subr.mxu0 0.0
  %381 = vmatpush1.msra.mxu0 0.0
  %382 = vmatprep.subr.mxu0 0.0
  %383 = vmatpush1.msra.mxu0 0.0
  %384 = vmatprep.subr.mxu0 0.0
  %385 = vmatpush1.msra.mxu0 0.0
  %386 = vmatprep.subr.mxu0 0.0
  %387 = vmatpush1.msra.mxu0 0.0
  %388 = vmatprep.subr.mxu0 0.0
  %389 = vmatpush1.msra.mxu0 0.0
  %390 = vmatprep.subr.mxu0 0.0
  %391 = vmatpush1.msra.mxu0 0.0
  %392 = vmatprep.subr.mxu0 0.0
  %393 = vmatpush1.msra.mxu0 0.0
  %394 = vmatprep.subr.mxu0 0.0
  %395 = vmatpush1.msra.mxu0 0.0
  %396 = vmatprep.subr.mxu0 0.0
  %397 = vmatpush1.msra.mxu0 0.0
  %398 = vmatprep.subr.mxu0 0.0
  %399 = vmatpush1.msra.mxu0 0.0
  %400 = vmatprep.subr.mxu0 0.0
  %401 = vmatpush1.msra.mxu0 0.0
  %402 = vmatprep.subr.mxu0 0.0
  %403 = vmatpush1.msra.mxu0 0.0
  %404 = vmatprep.mubr.f32.mxu0 0.0
  %405 = vmatmul.mubr.f32.gmra.mrb[0].mxu0 %v329
  %v406 = vpop.f32.mrb[0].mxu0
  %v407 = vadd.f32 %v310, %v406
  %v408 = vpop.f32.mrb[0].mxu0
  %409 = vmatprep.mubr.f32.mxu0 0.0
  %410 = vmatmul.mubr.f32.gmra.mrb[0].mxu0 %v332
  %v411 = vpop.f32.mrb[0].mxu0
  %v412 = vadd.f32 %v315, %v411
  %v413 = vpop.f32.mrb[0].mxu0
  %414 = vmatprep.mubr.f32.mxu0 0.0
  %415 = vmatmul.mubr.f32.gmra.mrb[0].mxu0 %v335
  %v416 = vpop.f32.mrb[0].mxu0
  %v417 = vadd.f32 %v320, %v416
  %v418 = vpop.f32.mrb[0].mxu0
  %419 = vmatprep.mubr.f32.mxu0 0.0
  %420 = vmatmul.mubr.f32.gmra.mrb[0].mxu0 %v338
  %v421 = vpop.f32.mrb[0].mxu0
  %v422 = vadd.f32 %v325, %v421
  %v423 = vpop.f32.mrb[0].mxu0
  %424 = vdwg.mxu0
  %s425 = scalar_lea.vmem %s1, 64
  %v426 = vld [vmem:[%s425] sm:$0xf]
  %v427 = vld [vmem:[%s425 + $0x4] sm:$0xf]
  %v428 = vld [vmem:[%s425 + $0x8] sm:$0xf]
  %v429 = vld [vmem:[%s425 + $0xc] sm:$0xf]
  %v430 = vld [vmem:[%s425 + $0x10] sm:$0xf]
  %v431 = vld [vmem:[%s425 + $0x14] sm:$0xf]
  %v432 = vld [vmem:[%s425 + $0x18] sm:$0xf]
  %v433 = vld [vmem:[%s425 + $0x1c] sm:$0xf]
  %v434 = vunpack.c.l.bf16 %v426
  %v435 = vunpack.c.l.bf16 %v427
  %v436 = vunpack.c.l.bf16 %v428
  %v437 = vunpack.c.l.bf16 %v429
  %v438 = vunpack.c.l.bf16 %v430
  %v439 = vunpack.c.l.bf16 %v431
  %v440 = vunpack.c.l.bf16 %v432
  %v441 = vunpack.c.l.bf16 %v433
  %v443 = vsel %vm230, %v193, 0
  %v446 = vsel %vm230, %v194, 0
  %v449 = vsel %vm230, %v195, 0
  %v452 = vsel %vm230, %v196, 0
  %454 = vmatprep.subr.mxu0 0.0
  %455 = vmatpush1.msra.mxu0 %v434
  %456 = vmatprep.subr.mxu0 0.0
  %457 = vmatpush1.msra.mxu0 %v435
  %458 = vmatprep.subr.mxu0 0.0
  %459 = vmatpush1.msra.mxu0 %v436
  %460 = vmatprep.subr.mxu0 0.0
  %461 = vmatpush1.msra.mxu0 %v437
  %462 = vmatprep.subr.mxu0 0.0
  %463 = vmatpush1.msra.mxu0 %v438
  %464 = vmatprep.subr.mxu0 0.0
  %465 = vmatpush1.msra.mxu0 %v439
  %466 = vmatprep.subr.mxu0 0.0
  %467 = vmatpush1.msra.mxu0 %v440
  %468 = vmatprep.subr.mxu0 0.0
  %469 = vmatpush1.msra.mxu0 %v441
  %470 = vmatprep.subr.mxu0 0.0
  %471 = vmatpush1.msra.mxu0 0.0
  %472 = vmatprep.subr.mxu0 0.0
  %473 = vmatpush1.msra.mxu0 0.0
  %474 = vmatprep.subr.mxu0 0.0
  %475 = vmatpush1.msra.mxu0 0.0
  %476 = vmatprep.subr.mxu0 0.0
  %477 = vmatpush1.msra.mxu0 0.0
  %478 = vmatprep.subr.mxu0 0.0
  %479 = vmatpush1.msra.mxu0 0.0
  %480 = vmatprep.subr.mxu0 0.0
  %481 = vmatpush1.msra.mxu0 0.0
  %482 = vmatprep.subr.mxu0 0.0
  %483 = vmatpush1.msra.mxu0 0.0
  %484 = vmatprep.subr.mxu0 0.0
  %485 = vmatpush1.msra.mxu0 0.0
  %486 = vmatprep.subr.mxu0 0.0
  %487 = vmatpush1.msra.mxu0 0.0
  %488 = vmatprep.subr.mxu0 0.0
  %489 = vmatpush1.msra.mxu0 0.0
  %490 = vmatprep.subr.mxu0 0.0
  %491 = vmatpush1.msra.mxu0 0.0
  %492 = vmatprep.subr.mxu0 0.0
  %493 = vmatpush1.msra.mxu0 0.0
  %494 = vmatprep.subr.mxu0 0.0
  %495 = vmatpush1.msra.mxu0 0.0
  %496 = vmatprep.subr.mxu0 0.0
  %497 = vmatpush1.msra.mxu0 0.0
  %498 = vmatprep.subr.mxu0 0.0
  %499 = vmatpush1.msra.mxu0 0.0
  %500 = vmatprep.subr.mxu0 0.0
  %501 = vmatpush1.msra.mxu0 0.0
  %502 = vmatprep.subr.mxu0 0.0
  %503 = vmatpush1.msra.mxu0 0.0
  %504 = vmatprep.subr.mxu0 0.0
  %505 = vmatpush1.msra.mxu0 0.0
  %506 = vmatprep.subr.mxu0 0.0
  %507 = vmatpush1.msra.mxu0 0.0
  %508 = vmatprep.subr.mxu0 0.0
  %509 = vmatpush1.msra.mxu0 0.0
  %510 = vmatprep.subr.mxu0 0.0
  %511 = vmatpush1.msra.mxu0 0.0
  %512 = vmatprep.subr.mxu0 0.0
  %513 = vmatpush1.msra.mxu0 0.0
  %514 = vmatprep.subr.mxu0 0.0
  %515 = vmatpush1.msra.mxu0 0.0
  %516 = vmatprep.subr.mxu0 0.0
  %517 = vmatpush1.msra.mxu0 0.0
  %518 = vmatprep.mubr.f32.mxu0 0.0
  %519 = vmatmul.mubr.f32.gmra.mrb[0].mxu0 %v443
  %v520 = vpop.f32.mrb[0].mxu0
  %v521 = vadd.f32 0.0, %v520
  %v522 = vpop.f32.mrb[0].mxu0
  %523 = vmatprep.mubr.f32.mxu0 0.0
  %524 = vmatmul.mubr.f32.gmra.mrb[0].mxu0 %v446
  %v525 = vpop.f32.mrb[0].mxu0
  %v526 = vadd.f32 0.0, %v525
  %v527 = vpop.f32.mrb[0].mxu0
  %528 = vmatprep.mubr.f32.mxu0 0.0
  %529 = vmatmul.mubr.f32.gmra.mrb[0].mxu0 %v449
  %v530 = vpop.f32.mrb[0].mxu0
  %v531 = vadd.f32 0.0, %v530
  %v532 = vpop.f32.mrb[0].mxu0
  %533 = vmatprep.mubr.f32.mxu0 0.0
  %534 = vmatmul.mubr.f32.gmra.mrb[0].mxu0 %v452
  %v535 = vpop.f32.mrb[0].mxu0
  %v536 = vadd.f32 0.0, %v535
  %v537 = vpop.f32.mrb[0].mxu0
  %538 = vdwg.mxu0
  %v539 = vadd.f32 %v407, %v521
  %v540 = vadd.f32 %v412, %v526
  %v541 = vadd.f32 %v417, %v531
  %v542 = vadd.f32 %v422, %v536
  %v543 = vadd.f32 %v539, %v540
  %v544 = vadd.f32 %v543, %v541
  %v545 = vadd.f32 %v544, %v542
  %v546 = vrot.slane %v545, 4
  %v547 = vadd.f32 %v545, %v546
  %v548 = vrot.slane %v547, 2
  %v549 = vadd.f32 %v547, %v548
  %v550 = vrot.slane %v549, 1
  %v551 = vadd.f32 %v549, %v550
  %v552 = vmul.f32 %v539, %v539
  %v553 = vmul.f32 %v540, %v540
  %v554 = vmul.f32 %v541, %v541
  %v555 = vmul.f32 %v542, %v542
  %v556 = vadd.f32 %v552, %v553
  %v557 = vadd.f32 %v556, %v554
  %v558 = vadd.f32 %v557, %v555
  %v559 = vrot.slane %v558, 4
  %v560 = vadd.f32 %v558, %v559
  %v561 = vrot.slane %v560, 2
  %v562 = vadd.f32 %v560, %v561
  %v563 = vrot.slane %v562, 1
  %v564 = vadd.f32 %v562, %v563
  %vm565 = vcmask 1040384
  %v566 = vsel %vm565, %v551, %v564
  %567 = vmatprep.subr.mxu0 0.0
  %568 = vmatpush1.msra.mxu0 %v102
  %569 = vmatprep.subr.mxu0 0.0
  %570 = vmatpush1.msra.mxu0 %v103
  %571 = vmatprep.subr.mxu0 0.0
  %572 = vmatpush1.msra.mxu0 %v104
  %573 = vmatprep.subr.mxu0 0.0
  %574 = vmatpush1.msra.mxu0 %v105
  %575 = vmatprep.subr.mxu0 0.0
  %576 = vmatpush1.msra.mxu0 %v106
  %577 = vmatprep.subr.mxu0 0.0
  %578 = vmatpush1.msra.mxu0 %v107
  %579 = vmatprep.subr.mxu0 0.0
  %580 = vmatpush1.msra.mxu0 %v108
  %581 = vmatprep.subr.mxu0 0.0
  %582 = vmatpush1.msra.mxu0 %v109
  %583 = vmatprep.subr.mxu0 0.0
  %584 = vmatpush1.msra.mxu0 %v110
  %585 = vmatprep.subr.mxu0 0.0
  %586 = vmatpush1.msra.mxu0 %v111
  %587 = vmatprep.subr.mxu0 0.0
  %588 = vmatpush1.msra.mxu0 %v112
  %589 = vmatprep.subr.mxu0 0.0
  %590 = vmatpush1.msra.mxu0 %v113
  %591 = vmatprep.subr.mxu0 0.0
  %592 = vmatpush1.msra.mxu0 %v114
  %593 = vmatprep.subr.mxu0 0.0
  %594 = vmatpush1.msra.mxu0 %v115
  %595 = vmatprep.subr.mxu0 0.0
  %596 = vmatpush1.msra.mxu0 %v116
  %597 = vmatprep.subr.mxu0 0.0
  %598 = vmatpush1.msra.mxu0 %v117
  %599 = vmatprep.subr.mxu0 0.0
  %600 = vmatpush1.msra.mxu0 0.0
  %601 = vmatprep.subr.mxu0 0.0
  %602 = vmatpush1.msra.mxu0 0.0
  %603 = vmatprep.subr.mxu0 0.0
  %604 = vmatpush1.msra.mxu0 0.0
  %605 = vmatprep.subr.mxu0 0.0
  %606 = vmatpush1.msra.mxu0 0.0
  %607 = vmatprep.subr.mxu0 0.0
  %608 = vmatpush1.msra.mxu0 0.0
  %609 = vmatprep.subr.mxu0 0.0
  %610 = vmatpush1.msra.mxu0 0.0
  %611 = vmatprep.subr.mxu0 0.0
  %612 = vmatpush1.msra.mxu0 0.0
  %613 = vmatprep.subr.mxu0 0.0
  %614 = vmatpush1.msra.mxu0 0.0
  %615 = vmatprep.subr.mxu0 0.0
  %616 = vmatpush1.msra.mxu0 0.0
  %617 = vmatprep.subr.mxu0 0.0
  %618 = vmatpush1.msra.mxu0 0.0
  %619 = vmatprep.subr.mxu0 0.0
  %620 = vmatpush1.msra.mxu0 0.0
  %621 = vmatprep.subr.mxu0 0.0
  %622 = vmatpush1.msra.mxu0 0.0
  %623 = vmatprep.subr.mxu0 0.0
  %624 = vmatpush1.msra.mxu0 0.0
  %625 = vmatprep.subr.mxu0 0.0
  %626 = vmatpush1.msra.mxu0 0.0
  %627 = vmatprep.subr.mxu0 0.0
  %628 = vmatpush1.msra.mxu0 0.0
  %629 = vmatprep.subr.mxu0 0.0
  %630 = vmatpush1.msra.mxu0 0.0
  %631 = vmatprep.mubr.f32.mxu0 0.0
  %632 = vmatmul.mubr.f32.gmra.mrb[0].mxu0 %v566
  %v633 = vpop.f32.mrb[0].mxu0
  %v634 = vadd.f32 0.0, %v633
  %v635 = vpop.f32.mrb[0].mxu0
  %636 = vdwg.mxu0
  %v637 = vmul.f32 %v634, 0.001953125
  %v638 = vmul.f32 %v637, %v637
  %v640 = vrot.slane %v638, 7
  %v642 = vsub.f32 %v637, %v640
  %v643 = vmax.f32 %v642, 0.0
  %v644 = vadd.f32 %v643, 1e-05
  %v645 = vrsqrt.pop %v644
  %v647 = vrot.slane %v645, 1
  %v649 = vmul.f32 %v150, %v647
  %v650 = vmul.f32 %v637, %v649
  %v652 = vrot.slane %v650, 7
  %v654 = vsub.f32 %v150, %v652
  %v655 = vlaneseq
  %v656 = vshrl.u32 %v655, 7
  %v657 = vsub.s32 0, %v656
  %v658 = vrot.slane %v649, %v657
  %v659 = vmul.f32 %v539, %v658
  %v660 = vmul.f32 %v540, %v658
  %v661 = vmul.f32 %v541, %v658
  %v662 = vmul.f32 %v542, %v658
  %v663 = vlaneseq
  %v664 = vshrl.u32 %v663, 7
  %v665 = vsub.s32 1, %v664
  %v666 = vrot.slane %v654, %v665
  %v667 = vadd.f32 %v659, %v666
  %v668 = vadd.f32 %v660, %v666
  %v669 = vadd.f32 %v661, %v666
  %v670 = vadd.f32 %v662, %v666
  %v671 = vmax.f32 %v667, 0.0
  %v672 = vmax.f32 %v668, 0.0
  %v673 = vmax.f32 %v669, 0.0
  %v674 = vmax.f32 %v670, 0.0
  %v675 = vrot.slane %v671, 7
  %v676 = vrot.slane %v672, 7
  %v677 = vrot.slane %v673, 7
  %v678 = vrot.slane %v674, 7
  %v679 = vsel %vm159, %v677, %v678
  %v680 = vsel %vm159, %v676, %v677
  %v681 = vsel %vm159, %v675, %v676
  %v682 = vsel %vm159, %v678, %v675
  %v683 = vsel %vm168, %v682, 0.0
  %v684 = vsel %vm169, %v681, 0.0
  %v685 = vsel %vm170, %v680, 0.0
  %v686 = vsel %vm171, %v679, 0.0
  %v687 = vrot.slane %v671, 1
  %v688 = vrot.slane %v672, 1
  %v689 = vrot.slane %v673, 1
  %v690 = vrot.slane %v674, 1
  %v691 = vsel %vm180, %v689, %v690
  %v692 = vsel %vm180, %v688, %v689
  %v693 = vsel %vm180, %v687, %v688
  %v694 = vsel %vm180, %v690, %v687
  %v695 = vsel %vm189, %v693, 0.0
  %v696 = vsel %vm190, %v692, 0.0
  %v697 = vsel %vm191, %v691, 0.0
  %v698 = vsel %vm192, %v694, 0.0
  %v699 = vld [vmem:[%s2] sm:$0xf]
  %v700 = vld [vmem:[%s2 + $0x4] sm:$0xf]
  %v701 = vld [vmem:[%s2 + $0x8] sm:$0xf]
  %v702 = vld [vmem:[%s2 + $0xc] sm:$0xf]
  %v703 = vld [vmem:[%s2 + $0x10] sm:$0xf]
  %v704 = vld [vmem:[%s2 + $0x14] sm:$0xf]
  %v705 = vld [vmem:[%s2 + $0x18] sm:$0xf]
  %v706 = vld [vmem:[%s2 + $0x1c] sm:$0xf]
  %v707 = vld [vmem:[%s2 + $0x20] sm:$0xf]
  %v708 = vld [vmem:[%s2 + $0x24] sm:$0xf]
  %v709 = vld [vmem:[%s2 + $0x28] sm:$0xf]
  %v710 = vld [vmem:[%s2 + $0x2c] sm:$0xf]
  %v711 = vld [vmem:[%s2 + $0x30] sm:$0xf]
  %v712 = vld [vmem:[%s2 + $0x34] sm:$0xf]
  %v713 = vld [vmem:[%s2 + $0x38] sm:$0xf]
  %v714 = vld [vmem:[%s2 + $0x3c] sm:$0xf]
  %v715 = vunpack.c.l.bf16 %v699
  %v716 = vunpack.c.l.bf16 %v700
  %v717 = vunpack.c.l.bf16 %v701
  %v718 = vunpack.c.l.bf16 %v702
  %v719 = vunpack.c.l.bf16 %v703
  %v720 = vunpack.c.l.bf16 %v704
  %v721 = vunpack.c.l.bf16 %v705
  %v722 = vunpack.c.l.bf16 %v706
  %v723 = vunpack.c.l.bf16 %v707
  %v724 = vunpack.c.l.bf16 %v708
  %v725 = vunpack.c.l.bf16 %v709
  %v726 = vunpack.c.l.bf16 %v710
  %v727 = vunpack.c.l.bf16 %v711
  %v728 = vunpack.c.l.bf16 %v712
  %v729 = vunpack.c.l.bf16 %v713
  %v730 = vunpack.c.l.bf16 %v714
  %s731 = scalar_lea.vmem %s2, 64
  %v732 = vld [vmem:[%s731] sm:$0xf]
  %v733 = vld [vmem:[%s731 + $0x4] sm:$0xf]
  %v734 = vld [vmem:[%s731 + $0x8] sm:$0xf]
  %v735 = vld [vmem:[%s731 + $0xc] sm:$0xf]
  %v736 = vld [vmem:[%s731 + $0x10] sm:$0xf]
  %v737 = vld [vmem:[%s731 + $0x14] sm:$0xf]
  %v738 = vld [vmem:[%s731 + $0x18] sm:$0xf]
  %v739 = vld [vmem:[%s731 + $0x1c] sm:$0xf]
  %v740 = vld [vmem:[%s731 + $0x20] sm:$0xf]
  %v741 = vld [vmem:[%s731 + $0x24] sm:$0xf]
  %v742 = vld [vmem:[%s731 + $0x28] sm:$0xf]
  %v743 = vld [vmem:[%s731 + $0x2c] sm:$0xf]
  %v744 = vld [vmem:[%s731 + $0x30] sm:$0xf]
  %v745 = vld [vmem:[%s731 + $0x34] sm:$0xf]
  %v746 = vld [vmem:[%s731 + $0x38] sm:$0xf]
  %v747 = vld [vmem:[%s731 + $0x3c] sm:$0xf]
  %v748 = vunpack.c.l.bf16 %v732
  %v749 = vunpack.c.l.bf16 %v733
  %v750 = vunpack.c.l.bf16 %v734
  %v751 = vunpack.c.l.bf16 %v735
  %v752 = vunpack.c.l.bf16 %v736
  %v753 = vunpack.c.l.bf16 %v737
  %v754 = vunpack.c.l.bf16 %v738
  %v755 = vunpack.c.l.bf16 %v739
  %v756 = vunpack.c.l.bf16 %v740
  %v757 = vunpack.c.l.bf16 %v741
  %v758 = vunpack.c.l.bf16 %v742
  %v759 = vunpack.c.l.bf16 %v743
  %v760 = vunpack.c.l.bf16 %v744
  %v761 = vunpack.c.l.bf16 %v745
  %v762 = vunpack.c.l.bf16 %v746
  %v763 = vunpack.c.l.bf16 %v747
  %764 = vmatprep.subr.mxu0 0.0
  %765 = vmatpush1.msra.mxu0 %v748
  %766 = vmatprep.subr.mxu0 0.0
  %767 = vmatpush1.msra.mxu0 %v749
  %768 = vmatprep.subr.mxu0 0.0
  %769 = vmatpush1.msra.mxu0 %v750
  %770 = vmatprep.subr.mxu0 0.0
  %771 = vmatpush1.msra.mxu0 %v751
  %772 = vmatprep.subr.mxu0 0.0
  %773 = vmatpush1.msra.mxu0 %v752
  %774 = vmatprep.subr.mxu0 0.0
  %775 = vmatpush1.msra.mxu0 %v753
  %776 = vmatprep.subr.mxu0 0.0
  %777 = vmatpush1.msra.mxu0 %v754
  %778 = vmatprep.subr.mxu0 0.0
  %779 = vmatpush1.msra.mxu0 %v755
  %780 = vmatprep.subr.mxu0 0.0
  %781 = vmatpush1.msra.mxu0 %v756
  %782 = vmatprep.subr.mxu0 0.0
  %783 = vmatpush1.msra.mxu0 %v757
  %784 = vmatprep.subr.mxu0 0.0
  %785 = vmatpush1.msra.mxu0 %v758
  %786 = vmatprep.subr.mxu0 0.0
  %787 = vmatpush1.msra.mxu0 %v759
  %788 = vmatprep.subr.mxu0 0.0
  %789 = vmatpush1.msra.mxu0 %v760
  %790 = vmatprep.subr.mxu0 0.0
  %791 = vmatpush1.msra.mxu0 %v761
  %792 = vmatprep.subr.mxu0 0.0
  %793 = vmatpush1.msra.mxu0 %v762
  %794 = vmatprep.subr.mxu0 0.0
  %795 = vmatpush1.msra.mxu0 %v763
  %796 = vmatprep.subr.mxu0 0.0
  %797 = vmatpush1.msra.mxu0 0.0
  %798 = vmatprep.subr.mxu0 0.0
  %799 = vmatpush1.msra.mxu0 0.0
  %800 = vmatprep.subr.mxu0 0.0
  %801 = vmatpush1.msra.mxu0 0.0
  %802 = vmatprep.subr.mxu0 0.0
  %803 = vmatpush1.msra.mxu0 0.0
  %804 = vmatprep.subr.mxu0 0.0
  %805 = vmatpush1.msra.mxu0 0.0
  %806 = vmatprep.subr.mxu0 0.0
  %807 = vmatpush1.msra.mxu0 0.0
  %808 = vmatprep.subr.mxu0 0.0
  %809 = vmatpush1.msra.mxu0 0.0
  %810 = vmatprep.subr.mxu0 0.0
  %811 = vmatpush1.msra.mxu0 0.0
  %812 = vmatprep.subr.mxu0 0.0
  %813 = vmatpush1.msra.mxu0 0.0
  %814 = vmatprep.subr.mxu0 0.0
  %815 = vmatpush1.msra.mxu0 0.0
  %816 = vmatprep.subr.mxu0 0.0
  %817 = vmatpush1.msra.mxu0 0.0
  %818 = vmatprep.subr.mxu0 0.0
  %819 = vmatpush1.msra.mxu0 0.0
  %820 = vmatprep.subr.mxu0 0.0
  %821 = vmatpush1.msra.mxu0 0.0
  %822 = vmatprep.subr.mxu0 0.0
  %823 = vmatpush1.msra.mxu0 0.0
  %824 = vmatprep.subr.mxu0 0.0
  %825 = vmatpush1.msra.mxu0 0.0
  %826 = vmatprep.subr.mxu0 0.0
  %827 = vmatpush1.msra.mxu0 0.0
  %828 = vmatprep.mubr.f32.mxu0 0.0
  %829 = vmatmul.mubr.f32.gmra.mrb[0].mxu0 %v671
  %v830 = vpop.f32.mrb[0].mxu0
  %v831 = vadd.f32 0.0, %v830
  %v832 = vpop.f32.mrb[0].mxu0
  %833 = vmatprep.mubr.f32.mxu0 0.0
  %834 = vmatmul.mubr.f32.gmra.mrb[0].mxu0 %v672
  %v835 = vpop.f32.mrb[0].mxu0
  %v836 = vadd.f32 0.0, %v835
  %v837 = vpop.f32.mrb[0].mxu0
  %838 = vmatprep.mubr.f32.mxu0 0.0
  %839 = vmatmul.mubr.f32.gmra.mrb[0].mxu0 %v673
  %v840 = vpop.f32.mrb[0].mxu0
  %v841 = vadd.f32 0.0, %v840
  %v842 = vpop.f32.mrb[0].mxu0
  %843 = vmatprep.mubr.f32.mxu0 0.0
  %844 = vmatmul.mubr.f32.gmra.mrb[0].mxu0 %v674
  %v845 = vpop.f32.mrb[0].mxu0
  %v846 = vadd.f32 0.0, %v845
  %v847 = vpop.f32.mrb[0].mxu0
  %848 = vdwg.mxu0
  %849 = vmatprep.subr.mxu0 0.0
  %850 = vmatpush1.msra.mxu0 %v715
  %851 = vmatprep.subr.mxu0 0.0
  %852 = vmatpush1.msra.mxu0 %v716
  %853 = vmatprep.subr.mxu0 0.0
  %854 = vmatpush1.msra.mxu0 %v717
  %855 = vmatprep.subr.mxu0 0.0
  %856 = vmatpush1.msra.mxu0 %v718
  %857 = vmatprep.subr.mxu0 0.0
  %858 = vmatpush1.msra.mxu0 %v719
  %859 = vmatprep.subr.mxu0 0.0
  %860 = vmatpush1.msra.mxu0 %v720
  %861 = vmatprep.subr.mxu0 0.0
  %862 = vmatpush1.msra.mxu0 %v721
  %863 = vmatprep.subr.mxu0 0.0
  %864 = vmatpush1.msra.mxu0 %v722
  %865 = vmatprep.subr.mxu0 0.0
  %866 = vmatpush1.msra.mxu0 %v723
  %867 = vmatprep.subr.mxu0 0.0
  %868 = vmatpush1.msra.mxu0 %v724
  %869 = vmatprep.subr.mxu0 0.0
  %870 = vmatpush1.msra.mxu0 %v725
  %871 = vmatprep.subr.mxu0 0.0
  %872 = vmatpush1.msra.mxu0 %v726
  %873 = vmatprep.subr.mxu0 0.0
  %874 = vmatpush1.msra.mxu0 %v727
  %875 = vmatprep.subr.mxu0 0.0
  %876 = vmatpush1.msra.mxu0 %v728
  %877 = vmatprep.subr.mxu0 0.0
  %878 = vmatpush1.msra.mxu0 %v729
  %879 = vmatprep.subr.mxu0 0.0
  %880 = vmatpush1.msra.mxu0 %v730
  %881 = vmatprep.subr.mxu0 0.0
  %882 = vmatpush1.msra.mxu0 0.0
  %883 = vmatprep.subr.mxu0 0.0
  %884 = vmatpush1.msra.mxu0 0.0
  %885 = vmatprep.subr.mxu0 0.0
  %886 = vmatpush1.msra.mxu0 0.0
  %887 = vmatprep.subr.mxu0 0.0
  %888 = vmatpush1.msra.mxu0 0.0
  %889 = vmatprep.subr.mxu0 0.0
  %890 = vmatpush1.msra.mxu0 0.0
  %891 = vmatprep.subr.mxu0 0.0
  %892 = vmatpush1.msra.mxu0 0.0
  %893 = vmatprep.subr.mxu0 0.0
  %894 = vmatpush1.msra.mxu0 0.0
  %895 = vmatprep.subr.mxu0 0.0
  %896 = vmatpush1.msra.mxu0 0.0
  %897 = vmatprep.subr.mxu0 0.0
  %898 = vmatpush1.msra.mxu0 0.0
  %899 = vmatprep.subr.mxu0 0.0
  %900 = vmatpush1.msra.mxu0 0.0
  %901 = vmatprep.subr.mxu0 0.0
  %902 = vmatpush1.msra.mxu0 0.0
  %903 = vmatprep.subr.mxu0 0.0
  %904 = vmatpush1.msra.mxu0 0.0
  %905 = vmatprep.subr.mxu0 0.0
  %906 = vmatpush1.msra.mxu0 0.0
  %907 = vmatprep.subr.mxu0 0.0
  %908 = vmatpush1.msra.mxu0 0.0
  %909 = vmatprep.subr.mxu0 0.0
  %910 = vmatpush1.msra.mxu0 0.0
  %911 = vmatprep.subr.mxu0 0.0
  %912 = vmatpush1.msra.mxu0 0.0
  %913 = vmatprep.mubr.f32.mxu0 0.0
  %914 = vmatmul.mubr.f32.gmra.mrb[0].mxu0 %v683
  %v915 = vpop.f32.mrb[0].mxu0
  %v916 = vadd.f32 %v831, %v915
  %v917 = vpop.f32.mrb[0].mxu0
  %918 = vmatprep.mubr.f32.mxu0 0.0
  %919 = vmatmul.mubr.f32.gmra.mrb[0].mxu0 %v684
  %v920 = vpop.f32.mrb[0].mxu0
  %v921 = vadd.f32 %v836, %v920
  %v922 = vpop.f32.mrb[0].mxu0
  %923 = vmatprep.mubr.f32.mxu0 0.0
  %924 = vmatmul.mubr.f32.gmra.mrb[0].mxu0 %v685
  %v925 = vpop.f32.mrb[0].mxu0
  %v926 = vadd.f32 %v841, %v925
  %v927 = vpop.f32.mrb[0].mxu0
  %928 = vmatprep.mubr.f32.mxu0 0.0
  %929 = vmatmul.mubr.f32.gmra.mrb[0].mxu0 %v686
  %v930 = vpop.f32.mrb[0].mxu0
  %v931 = vadd.f32 %v846, %v930
  %v932 = vpop.f32.mrb[0].mxu0
  %933 = vdwg.mxu0
  %s934 = scalar_lea.vmem %s2, 128
  %v935 = vld [vmem:[%s934] sm:$0xf]
  %v936 = vld [vmem:[%s934 + $0x4] sm:$0xf]
  %v937 = vld [vmem:[%s934 + $0x8] sm:$0xf]
  %v938 = vld [vmem:[%s934 + $0xc] sm:$0xf]
  %v939 = vld [vmem:[%s934 + $0x10] sm:$0xf]
  %v940 = vld [vmem:[%s934 + $0x14] sm:$0xf]
  %v941 = vld [vmem:[%s934 + $0x18] sm:$0xf]
  %v942 = vld [vmem:[%s934 + $0x1c] sm:$0xf]
  %v943 = vld [vmem:[%s934 + $0x20] sm:$0xf]
  %v944 = vld [vmem:[%s934 + $0x24] sm:$0xf]
  %v945 = vld [vmem:[%s934 + $0x28] sm:$0xf]
  %v946 = vld [vmem:[%s934 + $0x2c] sm:$0xf]
  %v947 = vld [vmem:[%s934 + $0x30] sm:$0xf]
  %v948 = vld [vmem:[%s934 + $0x34] sm:$0xf]
  %v949 = vld [vmem:[%s934 + $0x38] sm:$0xf]
  %v950 = vld [vmem:[%s934 + $0x3c] sm:$0xf]
  %v951 = vunpack.c.l.bf16 %v935
  %v952 = vunpack.c.l.bf16 %v936
  %v953 = vunpack.c.l.bf16 %v937
  %v954 = vunpack.c.l.bf16 %v938
  %v955 = vunpack.c.l.bf16 %v939
  %v956 = vunpack.c.l.bf16 %v940
  %v957 = vunpack.c.l.bf16 %v941
  %v958 = vunpack.c.l.bf16 %v942
  %v959 = vunpack.c.l.bf16 %v943
  %v960 = vunpack.c.l.bf16 %v944
  %v961 = vunpack.c.l.bf16 %v945
  %v962 = vunpack.c.l.bf16 %v946
  %v963 = vunpack.c.l.bf16 %v947
  %v964 = vunpack.c.l.bf16 %v948
  %v965 = vunpack.c.l.bf16 %v949
  %v966 = vunpack.c.l.bf16 %v950
  %967 = vmatprep.subr.mxu0 0.0
  %968 = vmatpush1.msra.mxu0 %v951
  %969 = vmatprep.subr.mxu0 0.0
  %970 = vmatpush1.msra.mxu0 %v952
  %971 = vmatprep.subr.mxu0 0.0
  %972 = vmatpush1.msra.mxu0 %v953
  %973 = vmatprep.subr.mxu0 0.0
  %974 = vmatpush1.msra.mxu0 %v954
  %975 = vmatprep.subr.mxu0 0.0
  %976 = vmatpush1.msra.mxu0 %v955
  %977 = vmatprep.subr.mxu0 0.0
  %978 = vmatpush1.msra.mxu0 %v956
  %979 = vmatprep.subr.mxu0 0.0
  %980 = vmatpush1.msra.mxu0 %v957
  %981 = vmatprep.subr.mxu0 0.0
  %982 = vmatpush1.msra.mxu0 %v958
  %983 = vmatprep.subr.mxu0 0.0
  %984 = vmatpush1.msra.mxu0 %v959
  %985 = vmatprep.subr.mxu0 0.0
  %986 = vmatpush1.msra.mxu0 %v960
  %987 = vmatprep.subr.mxu0 0.0
  %988 = vmatpush1.msra.mxu0 %v961
  %989 = vmatprep.subr.mxu0 0.0
  %990 = vmatpush1.msra.mxu0 %v962
  %991 = vmatprep.subr.mxu0 0.0
  %992 = vmatpush1.msra.mxu0 %v963
  %993 = vmatprep.subr.mxu0 0.0
  %994 = vmatpush1.msra.mxu0 %v964
  %995 = vmatprep.subr.mxu0 0.0
  %996 = vmatpush1.msra.mxu0 %v965
  %997 = vmatprep.subr.mxu0 0.0
  %998 = vmatpush1.msra.mxu0 %v966
  %999 = vmatprep.subr.mxu0 0.0
  %1000 = vmatpush1.msra.mxu0 0.0
  %1001 = vmatprep.subr.mxu0 0.0
  %1002 = vmatpush1.msra.mxu0 0.0
  %1003 = vmatprep.subr.mxu0 0.0
  %1004 = vmatpush1.msra.mxu0 0.0
  %1005 = vmatprep.subr.mxu0 0.0
  %1006 = vmatpush1.msra.mxu0 0.0
  %1007 = vmatprep.subr.mxu0 0.0
  %1008 = vmatpush1.msra.mxu0 0.0
  %1009 = vmatprep.subr.mxu0 0.0
  %1010 = vmatpush1.msra.mxu0 0.0
  %1011 = vmatprep.subr.mxu0 0.0
  %1012 = vmatpush1.msra.mxu0 0.0
  %1013 = vmatprep.subr.mxu0 0.0
  %1014 = vmatpush1.msra.mxu0 0.0
  %1015 = vmatprep.subr.mxu0 0.0
  %1016 = vmatpush1.msra.mxu0 0.0
  %1017 = vmatprep.subr.mxu0 0.0
  %1018 = vmatpush1.msra.mxu0 0.0
  %1019 = vmatprep.subr.mxu0 0.0
  %1020 = vmatpush1.msra.mxu0 0.0
  %1021 = vmatprep.subr.mxu0 0.0
  %1022 = vmatpush1.msra.mxu0 0.0
  %1023 = vmatprep.subr.mxu0 0.0
  %1024 = vmatpush1.msra.mxu0 0.0
  %1025 = vmatprep.subr.mxu0 0.0
  %1026 = vmatpush1.msra.mxu0 0.0
  %1027 = vmatprep.subr.mxu0 0.0
  %1028 = vmatpush1.msra.mxu0 0.0
  %1029 = vmatprep.subr.mxu0 0.0
  %1030 = vmatpush1.msra.mxu0 0.0
  %1031 = vmatprep.mubr.f32.mxu0 0.0
  %1032 = vmatmul.mubr.f32.gmra.mrb[0].mxu0 %v695
  %v1033 = vpop.f32.mrb[0].mxu0
  %v1034 = vadd.f32 0.0, %v1033
  %v1035 = vpop.f32.mrb[0].mxu0
  %1036 = vmatprep.mubr.f32.mxu0 0.0
  %1037 = vmatmul.mubr.f32.gmra.mrb[0].mxu0 %v696
  %v1038 = vpop.f32.mrb[0].mxu0
  %v1039 = vadd.f32 0.0, %v1038
  %v1040 = vpop.f32.mrb[0].mxu0
  %1041 = vmatprep.mubr.f32.mxu0 0.0
  %1042 = vmatmul.mubr.f32.gmra.mrb[0].mxu0 %v697
  %v1043 = vpop.f32.mrb[0].mxu0
  %v1044 = vadd.f32 0.0, %v1043
  %v1045 = vpop.f32.mrb[0].mxu0
  %1046 = vmatprep.mubr.f32.mxu0 0.0
  %1047 = vmatmul.mubr.f32.gmra.mrb[0].mxu0 %v698
  %v1048 = vpop.f32.mrb[0].mxu0
  %v1049 = vadd.f32 0.0, %v1048
  %v1050 = vpop.f32.mrb[0].mxu0
  %1051 = vdwg.mxu0
  %v1052 = vadd.f32 %v916, %v1034
  %v1053 = vadd.f32 %v921, %v1039
  %v1054 = vadd.f32 %v926, %v1044
  %v1055 = vadd.f32 %v931, %v1049
  %v1056 = vadd.f32 %v1052, %v1053
  %v1057 = vadd.f32 %v1056, %v1054
  %v1058 = vadd.f32 %v1057, %v1055
  %v1059 = vrot.slane %v1058, 4
  %v1060 = vadd.f32 %v1058, %v1059
  %v1061 = vrot.slane %v1060, 2
  %v1062 = vadd.f32 %v1060, %v1061
  %v1063 = vrot.slane %v1062, 1
  %v1064 = vadd.f32 %v1062, %v1063
  %v1065 = vmul.f32 %v1052, %v1052
  %v1066 = vmul.f32 %v1053, %v1053
  %v1067 = vmul.f32 %v1054, %v1054
  %v1068 = vmul.f32 %v1055, %v1055
  %v1069 = vadd.f32 %v1065, %v1066
  %v1070 = vadd.f32 %v1069, %v1067
  %v1071 = vadd.f32 %v1070, %v1068
  %v1072 = vrot.slane %v1071, 4
  %v1073 = vadd.f32 %v1071, %v1072
  %v1074 = vrot.slane %v1073, 2
  %v1075 = vadd.f32 %v1073, %v1074
  %v1076 = vrot.slane %v1075, 1
  %v1077 = vadd.f32 %v1075, %v1076
  %v1078 = vsel %vm565, %v1064, %v1077
  %1079 = vmatprep.subr.mxu0 0.0
  %1080 = vmatpush1.msra.mxu0 %v102
  %1081 = vmatprep.subr.mxu0 0.0
  %1082 = vmatpush1.msra.mxu0 %v103
  %1083 = vmatprep.subr.mxu0 0.0
  %1084 = vmatpush1.msra.mxu0 %v104
  %1085 = vmatprep.subr.mxu0 0.0
  %1086 = vmatpush1.msra.mxu0 %v105
  %1087 = vmatprep.subr.mxu0 0.0
  %1088 = vmatpush1.msra.mxu0 %v106
  %1089 = vmatprep.subr.mxu0 0.0
  %1090 = vmatpush1.msra.mxu0 %v107
  %1091 = vmatprep.subr.mxu0 0.0
  %1092 = vmatpush1.msra.mxu0 %v108
  %1093 = vmatprep.subr.mxu0 0.0
  %1094 = vmatpush1.msra.mxu0 %v109
  %1095 = vmatprep.subr.mxu0 0.0
  %1096 = vmatpush1.msra.mxu0 %v110
  %1097 = vmatprep.subr.mxu0 0.0
  %1098 = vmatpush1.msra.mxu0 %v111
  %1099 = vmatprep.subr.mxu0 0.0
  %1100 = vmatpush1.msra.mxu0 %v112
  %1101 = vmatprep.subr.mxu0 0.0
  %1102 = vmatpush1.msra.mxu0 %v113
  %1103 = vmatprep.subr.mxu0 0.0
  %1104 = vmatpush1.msra.mxu0 %v114
  %1105 = vmatprep.subr.mxu0 0.0
  %1106 = vmatpush1.msra.mxu0 %v115
  %1107 = vmatprep.subr.mxu0 0.0
  %1108 = vmatpush1.msra.mxu0 %v116
  %1109 = vmatprep.subr.mxu0 0.0
  %1110 = vmatpush1.msra.mxu0 %v117
  %1111 = vmatprep.subr.mxu0 0.0
  %1112 = vmatpush1.msra.mxu0 0.0
  %1113 = vmatprep.subr.mxu0 0.0
  %1114 = vmatpush1.msra.mxu0 0.0
  %1115 = vmatprep.subr.mxu0 0.0
  %1116 = vmatpush1.msra.mxu0 0.0
  %1117 = vmatprep.subr.mxu0 0.0
  %1118 = vmatpush1.msra.mxu0 0.0
  %1119 = vmatprep.subr.mxu0 0.0
  %1120 = vmatpush1.msra.mxu0 0.0
  %1121 = vmatprep.subr.mxu0 0.0
  %1122 = vmatpush1.msra.mxu0 0.0
  %1123 = vmatprep.subr.mxu0 0.0
  %1124 = vmatpush1.msra.mxu0 0.0
  %1125 = vmatprep.subr.mxu0 0.0
  %1126 = vmatpush1.msra.mxu0 0.0
  %1127 = vmatprep.subr.mxu0 0.0
  %1128 = vmatpush1.msra.mxu0 0.0
  %1129 = vmatprep.subr.mxu0 0.0
  %1130 = vmatpush1.msra.mxu0 0.0
  %1131 = vmatprep.subr.mxu0 0.0
  %1132 = vmatpush1.msra.mxu0 0.0
  %1133 = vmatprep.subr.mxu0 0.0
  %1134 = vmatpush1.msra.mxu0 0.0
  %1135 = vmatprep.subr.mxu0 0.0
  %1136 = vmatpush1.msra.mxu0 0.0
  %1137 = vmatprep.subr.mxu0 0.0
  %1138 = vmatpush1.msra.mxu0 0.0
  %1139 = vmatprep.subr.mxu0 0.0
  %1140 = vmatpush1.msra.mxu0 0.0
  %1141 = vmatprep.subr.mxu0 0.0
  %1142 = vmatpush1.msra.mxu0 0.0
  %1143 = vmatprep.mubr.f32.mxu0 0.0
  %1144 = vmatmul.mubr.f32.gmra.mrb[0].mxu0 %v1078
  %v1145 = vpop.f32.mrb[0].mxu0
  %v1146 = vadd.f32 0.0, %v1145
  %v1147 = vpop.f32.mrb[0].mxu0
  %1148 = vdwg.mxu0
  %v1149 = vmul.f32 %v1146, 0.001953125
  %v1150 = vmul.f32 %v1149, %v1149
  %v1152 = vrot.slane %v1150, 7
  %v1154 = vsub.f32 %v1149, %v1152
  %v1155 = vmax.f32 %v1154, 0.0
  %v1156 = vadd.f32 %v1155, 1e-05
  %v1157 = vrsqrt.pop %v1156
  %v1159 = vrot.slane %v1157, 7
  %v1161 = vmul.f32 %v150, %v1159
  %v1163 = vrot.slane %v1161, 2
  %v1165 = vmul.f32 %v1149, %v1163
  %v1167 = vrot.slane %v1165, 5
  %v1169 = vsub.f32 %v150, %v1167
  %v1170 = vlaneseq
  %v1171 = vshrl.u32 %v1170, 7
  %v1172 = vsub.s32 2, %v1171
  %v1173 = vrot.slane %v1161, %v1172
  %v1174 = vmul.f32 %v1052, %v1173
  %v1175 = vmul.f32 %v1053, %v1173
  %v1176 = vmul.f32 %v1054, %v1173
  %v1177 = vmul.f32 %v1055, %v1173
  %v1178 = vlaneseq
  %v1179 = vshrl.u32 %v1178, 7
  %v1180 = vsub.s32 3, %v1179
  %v1181 = vrot.slane %v1169, %v1180
  %v1182 = vadd.f32 %v1174, %v1181
  %v1183 = vadd.f32 %v1175, %v1181
  %v1184 = vadd.f32 %v1176, %v1181
  %v1185 = vadd.f32 %v1177, %v1181
  %v1186 = vmax.f32 %v1182, 0.0
  %v1187 = vmax.f32 %v1183, 0.0
  %v1188 = vmax.f32 %v1184, 0.0
  %v1189 = vmax.f32 %v1185, 0.0
  %1190 = vst [vmem:[%s6] sm:$0xff] %v1186
  %1191 = vst [vmem:[%s6 + $0x8] sm:$0xff] %v1187
  %1192 = vst [vmem:[%s6 + $0x10] sm:$0xff] %v1188
  %1193 = vst [vmem:[%s6 + $0x18] sm:$0xff] %v1189
  %v1194 = vld [vmem:[%s6] ss:$2 sm:$0xff]
  %s1195 = scalar_lea.vmem %s6, 16
  %v1196 = vld [vmem:[%s1195] ss:$2 sm:$0xff]
  %s1197 = scalar_lea.vmem %s6, 1
  %v1198 = vld [vmem:[%s1197] ss:$2 sm:$0xff]
  %s1199 = scalar_lea.vmem %s6, 17
  %v1200 = vld [vmem:[%s1199] ss:$2 sm:$0xff]
  %v1201 = vmax.f32 %v1194, %v1198
  %v1202 = vmax.f32 %v1196, %v1200
  %1203 = vrot.lane.b32.xlu0 %v1201, 120
  %v1204 = vpop.permute.xlu0 %1203
  %1205 = vrot.lane.b32.xlu0 %v1202, 120
  %v1206 = vpop.permute.xlu0 %1205
  %v1207 = vmax.f32 %v1201, %v1204
  %v1208 = vmax.f32 %v1202, %v1206
  %1209 = vmatprep.subr.mxu0 0.0
  %1210 = vmatpush1.msra.mxu0 %v134
  %1211 = vmatprep.subr.mxu0 0.0
  %1212 = vmatpush1.msra.mxu0 %v135
  %1213 = vmatprep.subr.mxu0 0.0
  %1214 = vmatpush1.msra.mxu0 %v136
  %1215 = vmatprep.subr.mxu0 0.0
  %1216 = vmatpush1.msra.mxu0 %v137
  %1217 = vmatprep.subr.mxu0 0.0
  %1218 = vmatpush1.msra.mxu0 %v138
  %1219 = vmatprep.subr.mxu0 0.0
  %1220 = vmatpush1.msra.mxu0 %v139
  %1221 = vmatprep.subr.mxu0 0.0
  %1222 = vmatpush1.msra.mxu0 %v140
  %1223 = vmatprep.subr.mxu0 0.0
  %1224 = vmatpush1.msra.mxu0 %v141
  %1225 = vmatprep.subr.mxu0 0.0
  %1226 = vmatpush1.msra.mxu0 %v142
  %1227 = vmatprep.subr.mxu0 0.0
  %1228 = vmatpush1.msra.mxu0 %v143
  %1229 = vmatprep.subr.mxu0 0.0
  %1230 = vmatpush1.msra.mxu0 %v144
  %1231 = vmatprep.subr.mxu0 0.0
  %1232 = vmatpush1.msra.mxu0 %v145
  %1233 = vmatprep.subr.mxu0 0.0
  %1234 = vmatpush1.msra.mxu0 %v146
  %1235 = vmatprep.subr.mxu0 0.0
  %1236 = vmatpush1.msra.mxu0 %v147
  %1237 = vmatprep.subr.mxu0 0.0
  %1238 = vmatpush1.msra.mxu0 %v148
  %1239 = vmatprep.subr.mxu0 0.0
  %1240 = vmatpush1.msra.mxu0 %v149
  %1241 = vmatprep.subr.mxu0 0.0
  %1242 = vmatpush1.msra.mxu0 0.0
  %1243 = vmatprep.subr.mxu0 0.0
  %1244 = vmatpush1.msra.mxu0 0.0
  %1245 = vmatprep.subr.mxu0 0.0
  %1246 = vmatpush1.msra.mxu0 0.0
  %1247 = vmatprep.subr.mxu0 0.0
  %1248 = vmatpush1.msra.mxu0 0.0
  %1249 = vmatprep.subr.mxu0 0.0
  %1250 = vmatpush1.msra.mxu0 0.0
  %1251 = vmatprep.subr.mxu0 0.0
  %1252 = vmatpush1.msra.mxu0 0.0
  %1253 = vmatprep.subr.mxu0 0.0
  %1254 = vmatpush1.msra.mxu0 0.0
  %1255 = vmatprep.subr.mxu0 0.0
  %1256 = vmatpush1.msra.mxu0 0.0
  %1257 = vmatprep.subr.mxu0 0.0
  %1258 = vmatpush1.msra.mxu0 0.0
  %1259 = vmatprep.subr.mxu0 0.0
  %1260 = vmatpush1.msra.mxu0 0.0
  %1261 = vmatprep.subr.mxu0 0.0
  %1262 = vmatpush1.msra.mxu0 0.0
  %1263 = vmatprep.subr.mxu0 0.0
  %1264 = vmatpush1.msra.mxu0 0.0
  %1265 = vmatprep.subr.mxu0 0.0
  %1266 = vmatpush1.msra.mxu0 0.0
  %1267 = vmatprep.subr.mxu0 0.0
  %1268 = vmatpush1.msra.mxu0 0.0
  %1269 = vmatprep.subr.mxu0 0.0
  %1270 = vmatpush1.msra.mxu0 0.0
  %1271 = vmatprep.subr.mxu0 0.0
  %1272 = vmatpush1.msra.mxu0 0.0
  %1273 = vmatprep.mubr.f32.mxu0 0.0
  %1274 = vmatmul.mubr.f32.gmra.mrb[0].mxu0 %v1207
  %v1275 = vpop.f32.mrb[0].mxu0
  %v1276 = vadd.f32 0.0, %v1275
  %v1277 = vpop.f32.mrb[0].mxu0
  %1278 = vmatprep.mubr.f32.mxu0 0.0
  %1279 = vmatmul.mubr.f32.gmra.mrb[0].mxu0 %v1208
  %v1280 = vpop.f32.mrb[0].mxu0
  %v1281 = vadd.f32 0.0, %v1280
  %v1282 = vpop.f32.mrb[0].mxu0
  %1283 = vdwg.mxu0
  %1284 = vst [vmem:[%s7] sm:$0xff] %v1276
  %1285 = vst [vmem:[%s7 + $0x8] sm:$0xff] %v1281
  // Predicated region
  $region26: #{downsample_block_forward.1} parent=0 // pred_check
    _
  $region27: #{downsample_block_forward.1} parent=0 // pred_check_branch
    %1287 = sbr.rel (0) target = $region29
  $region28: #{downsample_block_forward.1} parent=0 // pred_region
    _
  $region29: #{downsample_block_forward.1} parent=0 // pred_fallthru
    _
  // Predicated region
  $region30: #{downsample_block_forward.1} parent=0 // pred_check
    _
  $region31: #{downsample_block_forward.1} parent=0 // pred_check_branch
    %1289 = sbr.rel (0) target = $region33
  $region32: #{downsample_block_forward.1} parent=0 // pred_region
    _
  $region33: #{downsample_block_forward.1} parent=0 // pred_fallthru
    _
  // Predicated region
  $region34: #{downsample_block_forward.1} parent=0 // pred_check
    _
  $region35: #{downsample_block_forward.1} parent=0 // pred_check_branch
    %1291 = sbr.rel (0) target = $region37
  $region36: #{downsample_block_forward.1} parent=0 // pred_region
    _
  $region37: #{downsample_block_forward.1} parent=0 // pred_fallthru
    _
  // Predicated region
  $region38: #{downsample_block_forward.1} parent=0 // pred_check
    _
  $region39: #{downsample_block_forward.1} parent=0 // pred_check_branch
    %1293 = sbr.rel (0) target = $region41
  $region40: #{downsample_block_forward.1} parent=0 // pred_region
    _
  $region41: #{downsample_block_forward.1} parent=0 // pred_fallthru
    _

</llo_original>
